<compile_context>
chip_gen: v5e
topology: v5e:2x2
jax: 0.10.0
libtpu: 0.0.40
codegen_flags: <defaults>
</compile_context>

<pallas_src>
import jax
import jax.numpy as jnp
from jax.experimental import pallas as pl
from jax.experimental.pallas import tpu as pltpu


# ---------------------------------------------------------------------------
# Fused 4-layer encoder kernel (one pallas_call, grid over batch)
# ---------------------------------------------------------------------------
def _encoder_fused_kernel(x_ref, *refs):
    # refs = (S_1, BW_1, b_1, ..., S_4, BW_4, b_4, o_ref)
    o_ref = refs[-1]
    layer_refs = refs[:-1]
    assert len(layer_refs) % 3 == 0

    act = x_ref[0]                                    # (H0, W0*C0), bf16
    out_f32 = None
    for li in range(0, len(layer_refs), 3):
        s_ref, bw_ref, b_ref = layer_refs[li], layer_refs[li + 1], layer_refs[li + 2]
        acc = None
        for kh in range(3):                           # static unroll: 3 row taps
            # row selection (exact copy of bf16 rows / zero-pad rows), MXU
            rows = jnp.dot(s_ref[kh], act,
                           preferred_element_type=jnp.float32)       # (Ho, Wi*Ci)
            # width-taps + channel contraction folded into one matmul, MXU, f32 acc
            term = jnp.dot(rows.astype(jnp.bfloat16), bw_ref[kh],
                           preferred_element_type=jnp.float32)       # (Ho, Wo*Co)
            acc = term if acc is None else acc + term
        acc = acc + b_ref[...]                        # f32 bias (broadcast over rows)
        out_f32 = jnp.maximum(acc, 0.2 * acc)         # LeakyReLU(0.2), f32 on VPU
        act = out_f32.astype(jnp.bfloat16)            # bf16 feed for the next layer
    o_ref[0] = out_f32.astype(o_ref.dtype)


# ---------------------------------------------------------------------------
# Wrapper-side constant builders (pure jnp; tiny)
# ---------------------------------------------------------------------------
def _build_row_select(Hi, Ho):
    """S[kh, i, h] = 1 iff h == 2*i + kh - 1 (else 0; zero rows encode H zero-padding)."""
    kh = jnp.arange(3)[:, None, None]
    io = jnp.arange(Ho)[None, :, None]
    hi = jnp.arange(Hi)[None, None, :]
    return (hi == 2 * io + kh - 1).astype(jnp.bfloat16)          # (3, Ho, Hi)


def _build_scattered_weight(w_oihw, Wi, Wo):
    """BW[kh, w*Ci + c, j*Co + co] = sum_kw W[co, c, kh, kw] * [w == 2*j + kw - 1]."""
    Co, Ci, KH, KW = w_oihw.shape
    kw = jnp.arange(KW)[:, None, None]
    wi = jnp.arange(Wi)[None, :, None]
    jo = jnp.arange(Wo)[None, None, :]
    sel = (wi == 2 * jo + kw - 1).astype(jnp.float32)            # (KW, Wi, Wo)
    w_hwio = jnp.transpose(w_oihw, (2, 3, 1, 0)).astype(jnp.float32)  # (KH, KW, Ci, Co)
    bw = jnp.einsum("kwj,hkco->hwcjo", sel, w_hwio)              # (KH, Wi, Ci, Wo, Co)
    return bw.reshape(KH, Wi * Ci, Wo * Co).astype(jnp.bfloat16)


# ---------------------------------------------------------------------------
# Encoder forward (NCHW in / NCHW out, like the PyTorch module)
# ---------------------------------------------------------------------------
def init_encoder_params(in_channels, key):
    """Conv weights ~ N(0, 0.02) (as in the module's init_params); biases zero."""
    channels = [in_channels, 32, 64, 64, 64]
    params = []
    for i in range(4):
        key, wk = jax.random.split(key)
        cin, cout = channels[i], channels[i + 1]
        w = 0.02 * jax.random.normal(wk, (cout, cin, 3, 3), dtype=jnp.float32)
        b = jnp.zeros((cout,), dtype=jnp.float32)
        params.append((w, b))
    return params


@jax.jit
def encoder_forward(x_nchw, params):
    N, C0, H0, W0 = x_nchw.shape
    # NCHW -> flattened NHWC rows: (N, H, W*C), channels minor (lane dim).
    x_rows = jnp.transpose(x_nchw, (0, 2, 3, 1)).reshape(N, H0, W0 * C0)
    x_rows = x_rows.astype(jnp.bfloat16)

    # Per-layer constants for the fused kernel.
    layer_ops = []
    Hi, Wi, Ci = H0, W0, C0
    for (w, b) in params:
        Co = w.shape[0]
        Ho = (Hi - 1) // 2 + 1
        Wo = (Wi - 1) // 2 + 1
        layer_ops.append(_build_row_select(Hi, Ho))                       # (3, Ho, Hi) bf16
        layer_ops.append(_build_scattered_weight(w, Wi, Wo))              # (3, Wi*Ci, Wo*Co) bf16
        layer_ops.append(jnp.tile(b.astype(jnp.float32), Wo).reshape(1, Wo * Co))  # f32 bias
        Hi, Wi, Ci = Ho, Wo, Co
    Hf, Wf, Cf = Hi, Wi, Ci

    def _const_spec(shape):
        nd = len(shape)
        return pl.BlockSpec(shape, lambda n, _nd=nd: (0,) * _nd)

    in_specs = [pl.BlockSpec((1, H0, W0 * C0), lambda n: (n, 0, 0))]
    in_specs += [_const_spec(a.shape) for a in layer_ops]

    out = pl.pallas_call(
        _encoder_fused_kernel,
        grid=(N,),
        in_specs=in_specs,
        out_specs=pl.BlockSpec((1, Hf, Wf * Cf), lambda n: (n, 0, 0)),
        out_shape=jax.ShapeDtypeStruct((N, Hf, Wf * Cf), jnp.float32),
        compiler_params=pltpu.CompilerParams(
            dimension_semantics=("parallel",)),   # v7x: shard images across both TCs
    )(x_rows, *layer_ops)

    z = out.reshape(N, Hf, Wf, Cf)
    return jnp.transpose(z, (0, 3, 1, 2))         # -> NCHW


# Pure-JAX reference (lax conv, f32) for a correctness sanity check.
def encoder_forward_ref(x_nchw, params):
    x = jnp.transpose(x_nchw, (0, 2, 3, 1)).astype(jnp.float32)
    for (w, b) in params:
        w_hwio = jnp.transpose(w, (2, 3, 1, 0))
        y = jax.lax.conv_general_dilated(
            x, w_hwio, window_strides=(2, 2), padding=((1, 1), (1, 1)),
            dimension_numbers=("NHWC", "HWIO", "NHWC"))
        y = y + b.reshape(1, 1, 1, -1)
        x = jnp.where(y > 0, y, 0.2 * y)
    return jnp.transpose(x, (0, 3, 1, 2))


def _rel_err(a, b):
    return float(jnp.max(jnp.abs(a - b)) / (jnp.max(jnp.abs(b)) + 1e-12))


if __name__ == "__main__":
    key = jax.random.PRNGKey(0)
    key, xk = jax.random.split(key)

    # Small, module-consistent shapes: input_shape=[1, 16, 16], batch=2 -> x: (2, 1, 16, 16)
    in_channels, H, W = 1, 16, 16
    x = jax.random.normal(xk, (2, in_channels, H, W), dtype=jnp.float32)
    params = init_encoder_params(in_channels, key)

    z = jax.block_until_ready(encoder_forward(x, params))
    z_ref = jax.block_until_ready(encoder_forward_ref(x, params))
    assert z.shape == (2, 64, 1, 1), z.shape
    # bf16 MXU feed -> relaxed (relative) tolerance vs. the f32 lax.conv reference.
    assert _rel_err(z, z_ref) < 5e-2, _rel_err(z, z_ref)

    # Module default input_shape=[1, 28, 28] (odd spatial sizes exercise the padding taps).
    key, xk2 = jax.random.split(key)
    x28 = jax.random.normal(xk2, (2, in_channels, 28, 28), dtype=jnp.float32)
    z28 = jax.block_until_ready(encoder_forward(x28, params))
    z28_ref = jax.block_until_ready(encoder_forward_ref(x28, params))
    assert z28.shape == (2, 64, 2, 2), z28.shape
    assert _rel_err(z28, z28_ref) < 5e-2, _rel_err(z28, z28_ref)

    print("KERNEL_OK")
</pallas_src>

<mosaic_0001>
module attributes {stable_mosaic.version = 11 : i64} {
  func.func @_encoder_fused_kernel(%arg0: i32, %arg1: memref<1x16x16xbf16, #tpu.memory_space<vmem>>, %arg2: memref<3x8x16xbf16, #tpu.memory_space<vmem>>, %arg3: memref<3x16x256xbf16, #tpu.memory_space<vmem>>, %arg4: memref<1x256xf32, #tpu.memory_space<vmem>>, %arg5: memref<3x4x8xbf16, #tpu.memory_space<vmem>>, %arg6: memref<3x256x256xbf16, #tpu.memory_space<vmem>>, %arg7: memref<1x256xf32, #tpu.memory_space<vmem>>, %arg8: memref<3x2x4xbf16, #tpu.memory_space<vmem>>, %arg9: memref<3x256x128xbf16, #tpu.memory_space<vmem>>, %arg10: memref<1x128xf32, #tpu.memory_space<vmem>>, %arg11: memref<3x1x2xbf16, #tpu.memory_space<vmem>>, %arg12: memref<3x128x64xbf16, #tpu.memory_space<vmem>>, %arg13: memref<1x64xf32, #tpu.memory_space<vmem>>, %arg14: memref<1x1x64xf32, #tpu.memory_space<vmem>>) attributes {dimension_semantics = [#tpu.dimension_semantics<parallel>], iteration_bounds = array<i64: 2>, scalar_prefetch = 0 : i64, scratch_operands = 0 : i64, tpu.core_type = #tpu.core_type<tc>, window_params = [{transform_indices = @transform_0, window_bounds = array<i64: 1, 16, 16>}, {pipeline_mode = #tpu.pipeline_mode<synchronous>, transform_indices = @transform_1, window_bounds = array<i64: 3, 8, 16>}, {pipeline_mode = #tpu.pipeline_mode<synchronous>, transform_indices = @transform_2, window_bounds = array<i64: 3, 16, 256>}, {pipeline_mode = #tpu.pipeline_mode<synchronous>, transform_indices = @transform_3, window_bounds = array<i64: 1, 256>}, {pipeline_mode = #tpu.pipeline_mode<synchronous>, transform_indices = @transform_4, window_bounds = array<i64: 3, 4, 8>}, {pipeline_mode = #tpu.pipeline_mode<synchronous>, transform_indices = @transform_5, window_bounds = array<i64: 3, 256, 256>}, {pipeline_mode = #tpu.pipeline_mode<synchronous>, transform_indices = @transform_6, window_bounds = array<i64: 1, 256>}, {pipeline_mode = #tpu.pipeline_mode<synchronous>, transform_indices = @transform_7, window_bounds = array<i64: 3, 2, 4>}, {pipeline_mode = #tpu.pipeline_mode<synchronous>, transform_indices = @transform_8, window_bounds = array<i64: 3, 256, 128>}, {pipeline_mode = #tpu.pipeline_mode<synchronous>, transform_indices = @transform_9, window_bounds = array<i64: 1, 128>}, {pipeline_mode = #tpu.pipeline_mode<synchronous>, transform_indices = @transform_10, window_bounds = array<i64: 3, 1, 2>}, {pipeline_mode = #tpu.pipeline_mode<synchronous>, transform_indices = @transform_11, window_bounds = array<i64: 3, 128, 64>}, {pipeline_mode = #tpu.pipeline_mode<synchronous>, transform_indices = @transform_12, window_bounds = array<i64: 1, 64>}, {transform_indices = @transform_13, window_bounds = array<i64: 1, 1, 64>}]} {
    %c0 = arith.constant 0 : index
    %c0_0 = arith.constant 0 : index
    %c0_1 = arith.constant 0 : index
    %0 = vector.load %arg1[%c0, %c0_0, %c0_1] : memref<1x16x16xbf16, #tpu.memory_space<vmem>>, vector<1x16x16xbf16>
    %1 = vector.shape_cast %0 : vector<1x16x16xbf16> to vector<16x16xbf16>
    %c0_2 = arith.constant 0 : index
    %c0_3 = arith.constant 0 : index
    %c0_4 = arith.constant 0 : index
    %2 = vector.load %arg2[%c0_2, %c0_3, %c0_4] : memref<3x8x16xbf16, #tpu.memory_space<vmem>>, vector<1x8x16xbf16>
    %3 = vector.shape_cast %2 : vector<1x8x16xbf16> to vector<8x16xbf16>
    %cst = arith.constant dense<0.000000e+00> : vector<8x16xf32>
    %4 = tpu.matmul %3, %1, %cst {dimension_numbers = #tpu.dot_dimension_numbers<[1], [0], [0], [1], [0, 0, 1, 1], [], []>} : vector<8x16xbf16>, vector<16x16xbf16>, vector<8x16xf32> -> vector<8x16xf32>
    %5 = arith.truncf %4 : vector<8x16xf32> to vector<8x16xbf16>
    %c0_5 = arith.constant 0 : index
    %c0_6 = arith.constant 0 : index
    %c0_7 = arith.constant 0 : index
    %6 = vector.load %arg3[%c0_5, %c0_6, %c0_7] : memref<3x16x256xbf16, #tpu.memory_space<vmem>>, vector<1x16x256xbf16>
    %7 = vector.shape_cast %6 : vector<1x16x256xbf16> to vector<16x256xbf16>
    %cst_8 = arith.constant dense<0.000000e+00> : vector<8x256xf32>
    %8 = tpu.matmul %5, %7, %cst_8 {dimension_numbers = #tpu.dot_dimension_numbers<[1], [0], [0], [1], [0, 0, 1, 1], [], []>} : vector<8x16xbf16>, vector<16x256xbf16>, vector<8x256xf32> -> vector<8x256xf32>
    %c1 = arith.constant 1 : index
    %c0_9 = arith.constant 0 : index
    %c0_10 = arith.constant 0 : index
    %9 = vector.load %arg2[%c1, %c0_9, %c0_10] : memref<3x8x16xbf16, #tpu.memory_space<vmem>>, vector<1x8x16xbf16>
    %10 = vector.shape_cast %9 : vector<1x8x16xbf16> to vector<8x16xbf16>
    %cst_11 = arith.constant dense<0.000000e+00> : vector<8x16xf32>
    %11 = tpu.matmul %10, %1, %cst_11 {dimension_numbers = #tpu.dot_dimension_numbers<[1], [0], [0], [1], [0, 0, 1, 1], [], []>} : vector<8x16xbf16>, vector<16x16xbf16>, vector<8x16xf32> -> vector<8x16xf32>
    %12 = arith.truncf %11 : vector<8x16xf32> to vector<8x16xbf16>
    %c1_12 = arith.constant 1 : index
    %c0_13 = arith.constant 0 : index
    %c0_14 = arith.constant 0 : index
    %13 = vector.load %arg3[%c1_12, %c0_13, %c0_14] : memref<3x16x256xbf16, #tpu.memory_space<vmem>>, vector<1x16x256xbf16>
    %14 = vector.shape_cast %13 : vector<1x16x256xbf16> to vector<16x256xbf16>
    %cst_15 = arith.constant dense<0.000000e+00> : vector<8x256xf32>
    %15 = tpu.matmul %12, %14, %cst_15 {dimension_numbers = #tpu.dot_dimension_numbers<[1], [0], [0], [1], [0, 0, 1, 1], [], []>} : vector<8x16xbf16>, vector<16x256xbf16>, vector<8x256xf32> -> vector<8x256xf32>
    %16 = arith.addf %8, %15 : vector<8x256xf32>
    %c2 = arith.constant 2 : index
    %c0_16 = arith.constant 0 : index
    %c0_17 = arith.constant 0 : index
    %17 = vector.load %arg2[%c2, %c0_16, %c0_17] : memref<3x8x16xbf16, #tpu.memory_space<vmem>>, vector<1x8x16xbf16>
    %18 = vector.shape_cast %17 : vector<1x8x16xbf16> to vector<8x16xbf16>
    %cst_18 = arith.constant dense<0.000000e+00> : vector<8x16xf32>
    %19 = tpu.matmul %18, %1, %cst_18 {dimension_numbers = #tpu.dot_dimension_numbers<[1], [0], [0], [1], [0, 0, 1, 1], [], []>} : vector<8x16xbf16>, vector<16x16xbf16>, vector<8x16xf32> -> vector<8x16xf32>
    %20 = arith.truncf %19 : vector<8x16xf32> to vector<8x16xbf16>
    %c2_19 = arith.constant 2 : index
    %c0_20 = arith.constant 0 : index
    %c0_21 = arith.constant 0 : index
    %21 = vector.load %arg3[%c2_19, %c0_20, %c0_21] : memref<3x16x256xbf16, #tpu.memory_space<vmem>>, vector<1x16x256xbf16>
    %22 = vector.shape_cast %21 : vector<1x16x256xbf16> to vector<16x256xbf16>
    %cst_22 = arith.constant dense<0.000000e+00> : vector<8x256xf32>
    %23 = tpu.matmul %20, %22, %cst_22 {dimension_numbers = #tpu.dot_dimension_numbers<[1], [0], [0], [1], [0, 0, 1, 1], [], []>} : vector<8x16xbf16>, vector<16x256xbf16>, vector<8x256xf32> -> vector<8x256xf32>
    %24 = arith.addf %16, %23 : vector<8x256xf32>
    %c0_23 = arith.constant 0 : index
    %c0_24 = arith.constant 0 : index
    %25 = vector.load %arg4[%c0_23, %c0_24] : memref<1x256xf32, #tpu.memory_space<vmem>>, vector<1x256xf32>
    %26 = vector.broadcast %25 : vector<1x256xf32> to vector<8x256xf32>
    %27 = arith.addf %24, %26 : vector<8x256xf32>
    %cst_25 = arith.constant 2.000000e-01 : f32
    %28 = vector.broadcast %cst_25 : f32 to vector<8x256xf32>
    %29 = arith.mulf %28, %27 : vector<8x256xf32>
    %30 = arith.maximumf %27, %29 : vector<8x256xf32>
    %31 = arith.truncf %30 : vector<8x256xf32> to vector<8x256xbf16>
    %c0_26 = arith.constant 0 : index
    %c0_27 = arith.constant 0 : index
    %c0_28 = arith.constant 0 : index
    %32 = vector.load %arg5[%c0_26, %c0_27, %c0_28] : memref<3x4x8xbf16, #tpu.memory_space<vmem>>, vector<1x4x8xbf16>
    %33 = vector.shape_cast %32 : vector<1x4x8xbf16> to vector<4x8xbf16>
    %cst_29 = arith.constant dense<0.000000e+00> : vector<4x256xf32>
    %34 = tpu.matmul %33, %31, %cst_29 {dimension_numbers = #tpu.dot_dimension_numbers<[1], [0], [0], [1], [0, 0, 1, 1], [], []>} : vector<4x8xbf16>, vector<8x256xbf16>, vector<4x256xf32> -> vector<4x256xf32>
    %35 = arith.truncf %34 : vector<4x256xf32> to vector<4x256xbf16>
    %c0_30 = arith.constant 0 : index
    %c0_31 = arith.constant 0 : index
    %c0_32 = arith.constant 0 : index
    %36 = vector.load %arg6[%c0_30, %c0_31, %c0_32] : memref<3x256x256xbf16, #tpu.memory_space<vmem>>, vector<1x256x256xbf16>
    %37 = vector.shape_cast %36 : vector<1x256x256xbf16> to vector<256x256xbf16>
    %cst_33 = arith.constant dense<0.000000e+00> : vector<4x256xf32>
    %38 = tpu.matmul %35, %37, %cst_33 {dimension_numbers = #tpu.dot_dimension_numbers<[1], [0], [0], [1], [0, 0, 1, 1], [], []>} : vector<4x256xbf16>, vector<256x256xbf16>, vector<4x256xf32> -> vector<4x256xf32>
    %c1_34 = arith.constant 1 : index
    %c0_35 = arith.constant 0 : index
    %c0_36 = arith.constant 0 : index
    %39 = vector.load %arg5[%c1_34, %c0_35, %c0_36] : memref<3x4x8xbf16, #tpu.memory_space<vmem>>, vector<1x4x8xbf16>
    %40 = vector.shape_cast %39 : vector<1x4x8xbf16> to vector<4x8xbf16>
    %cst_37 = arith.constant dense<0.000000e+00> : vector<4x256xf32>
    %41 = tpu.matmul %40, %31, %cst_37 {dimension_numbers = #tpu.dot_dimension_numbers<[1], [0], [0], [1], [0, 0, 1, 1], [], []>} : vector<4x8xbf16>, vector<8x256xbf16>, vector<4x256xf32> -> vector<4x256xf32>
    %42 = arith.truncf %41 : vector<4x256xf32> to vector<4x256xbf16>
    %c1_38 = arith.constant 1 : index
    %c0_39 = arith.constant 0 : index
    %c0_40 = arith.constant 0 : index
    %43 = vector.load %arg6[%c1_38, %c0_39, %c0_40] : memref<3x256x256xbf16, #tpu.memory_space<vmem>>, vector<1x256x256xbf16>
    %44 = vector.shape_cast %43 : vector<1x256x256xbf16> to vector<256x256xbf16>
    %cst_41 = arith.constant dense<0.000000e+00> : vector<4x256xf32>
    %45 = tpu.matmul %42, %44, %cst_41 {dimension_numbers = #tpu.dot_dimension_numbers<[1], [0], [0], [1], [0, 0, 1, 1], [], []>} : vector<4x256xbf16>, vector<256x256xbf16>, vector<4x256xf32> -> vector<4x256xf32>
    %46 = arith.addf %38, %45 : vector<4x256xf32>
    %c2_42 = arith.constant 2 : index
    %c0_43 = arith.constant 0 : index
    %c0_44 = arith.constant 0 : index
    %47 = vector.load %arg5[%c2_42, %c0_43, %c0_44] : memref<3x4x8xbf16, #tpu.memory_space<vmem>>, vector<1x4x8xbf16>
    %48 = vector.shape_cast %47 : vector<1x4x8xbf16> to vector<4x8xbf16>
    %cst_45 = arith.constant dense<0.000000e+00> : vector<4x256xf32>
    %49 = tpu.matmul %48, %31, %cst_45 {dimension_numbers = #tpu.dot_dimension_numbers<[1], [0], [0], [1], [0, 0, 1, 1], [], []>} : vector<4x8xbf16>, vector<8x256xbf16>, vector<4x256xf32> -> vector<4x256xf32>
    %50 = arith.truncf %49 : vector<4x256xf32> to vector<4x256xbf16>
    %c2_46 = arith.constant 2 : index
    %c0_47 = arith.constant 0 : index
    %c0_48 = arith.constant 0 : index
    %51 = vector.load %arg6[%c2_46, %c0_47, %c0_48] : memref<3x256x256xbf16, #tpu.memory_space<vmem>>, vector<1x256x256xbf16>
    %52 = vector.shape_cast %51 : vector<1x256x256xbf16> to vector<256x256xbf16>
    %cst_49 = arith.constant dense<0.000000e+00> : vector<4x256xf32>
    %53 = tpu.matmul %50, %52, %cst_49 {dimension_numbers = #tpu.dot_dimension_numbers<[1], [0], [0], [1], [0, 0, 1, 1], [], []>} : vector<4x256xbf16>, vector<256x256xbf16>, vector<4x256xf32> -> vector<4x256xf32>
    %54 = arith.addf %46, %53 : vector<4x256xf32>
    %c0_50 = arith.constant 0 : index
    %c0_51 = arith.constant 0 : index
    %55 = vector.load %arg7[%c0_50, %c0_51] : memref<1x256xf32, #tpu.memory_space<vmem>>, vector<1x256xf32>
    %56 = vector.broadcast %55 : vector<1x256xf32> to vector<4x256xf32>
    %57 = arith.addf %54, %56 : vector<4x256xf32>
    %cst_52 = arith.constant 2.000000e-01 : f32
    %58 = vector.broadcast %cst_52 : f32 to vector<4x256xf32>
    %59 = arith.mulf %58, %57 : vector<4x256xf32>
    %60 = arith.maximumf %57, %59 : vector<4x256xf32>
    %61 = arith.truncf %60 : vector<4x256xf32> to vector<4x256xbf16>
    %c0_53 = arith.constant 0 : index
    %c0_54 = arith.constant 0 : index
    %c0_55 = arith.constant 0 : index
    %62 = vector.load %arg8[%c0_53, %c0_54, %c0_55] : memref<3x2x4xbf16, #tpu.memory_space<vmem>>, vector<1x2x4xbf16>
    %63 = vector.shape_cast %62 : vector<1x2x4xbf16> to vector<2x4xbf16>
    %cst_56 = arith.constant dense<0.000000e+00> : vector<2x256xf32>
    %64 = tpu.matmul %63, %61, %cst_56 {dimension_numbers = #tpu.dot_dimension_numbers<[1], [0], [0], [1], [0, 0, 1, 1], [], []>} : vector<2x4xbf16>, vector<4x256xbf16>, vector<2x256xf32> -> vector<2x256xf32>
    %65 = arith.truncf %64 : vector<2x256xf32> to vector<2x256xbf16>
    %c0_57 = arith.constant 0 : index
    %c0_58 = arith.constant 0 : index
    %c0_59 = arith.constant 0 : index
    %66 = vector.load %arg9[%c0_57, %c0_58, %c0_59] : memref<3x256x128xbf16, #tpu.memory_space<vmem>>, vector<1x256x128xbf16>
    %67 = vector.shape_cast %66 : vector<1x256x128xbf16> to vector<256x128xbf16>
    %cst_60 = arith.constant dense<0.000000e+00> : vector<2x128xf32>
    %68 = tpu.matmul %65, %67, %cst_60 {dimension_numbers = #tpu.dot_dimension_numbers<[1], [0], [0], [1], [0, 0, 1, 1], [], []>} : vector<2x256xbf16>, vector<256x128xbf16>, vector<2x128xf32> -> vector<2x128xf32>
    %c1_61 = arith.constant 1 : index
    %c0_62 = arith.constant 0 : index
    %c0_63 = arith.constant 0 : index
    %69 = vector.load %arg8[%c1_61, %c0_62, %c0_63] : memref<3x2x4xbf16, #tpu.memory_space<vmem>>, vector<1x2x4xbf16>
    %70 = vector.shape_cast %69 : vector<1x2x4xbf16> to vector<2x4xbf16>
    %cst_64 = arith.constant dense<0.000000e+00> : vector<2x256xf32>
    %71 = tpu.matmul %70, %61, %cst_64 {dimension_numbers = #tpu.dot_dimension_numbers<[1], [0], [0], [1], [0, 0, 1, 1], [], []>} : vector<2x4xbf16>, vector<4x256xbf16>, vector<2x256xf32> -> vector<2x256xf32>
    %72 = arith.truncf %71 : vector<2x256xf32> to vector<2x256xbf16>
    %c1_65 = arith.constant 1 : index
    %c0_66 = arith.constant 0 : index
    %c0_67 = arith.constant 0 : index
    %73 = vector.load %arg9[%c1_65, %c0_66, %c0_67] : memref<3x256x128xbf16, #tpu.memory_space<vmem>>, vector<1x256x128xbf16>
    %74 = vector.shape_cast %73 : vector<1x256x128xbf16> to vector<256x128xbf16>
    %cst_68 = arith.constant dense<0.000000e+00> : vector<2x128xf32>
    %75 = tpu.matmul %72, %74, %cst_68 {dimension_numbers = #tpu.dot_dimension_numbers<[1], [0], [0], [1], [0, 0, 1, 1], [], []>} : vector<2x256xbf16>, vector<256x128xbf16>, vector<2x128xf32> -> vector<2x128xf32>
    %76 = arith.addf %68, %75 : vector<2x128xf32>
    %c2_69 = arith.constant 2 : index
    %c0_70 = arith.constant 0 : index
    %c0_71 = arith.constant 0 : index
    %77 = vector.load %arg8[%c2_69, %c0_70, %c0_71] : memref<3x2x4xbf16, #tpu.memory_space<vmem>>, vector<1x2x4xbf16>
    %78 = vector.shape_cast %77 : vector<1x2x4xbf16> to vector<2x4xbf16>
    %cst_72 = arith.constant dense<0.000000e+00> : vector<2x256xf32>
    %79 = tpu.matmul %78, %61, %cst_72 {dimension_numbers = #tpu.dot_dimension_numbers<[1], [0], [0], [1], [0, 0, 1, 1], [], []>} : vector<2x4xbf16>, vector<4x256xbf16>, vector<2x256xf32> -> vector<2x256xf32>
    %80 = arith.truncf %79 : vector<2x256xf32> to vector<2x256xbf16>
    %c2_73 = arith.constant 2 : index
    %c0_74 = arith.constant 0 : index
    %c0_75 = arith.constant 0 : index
    %81 = vector.load %arg9[%c2_73, %c0_74, %c0_75] : memref<3x256x128xbf16, #tpu.memory_space<vmem>>, vector<1x256x128xbf16>
    %82 = vector.shape_cast %81 : vector<1x256x128xbf16> to vector<256x128xbf16>
    %cst_76 = arith.constant dense<0.000000e+00> : vector<2x128xf32>
    %83 = tpu.matmul %80, %82, %cst_76 {dimension_numbers = #tpu.dot_dimension_numbers<[1], [0], [0], [1], [0, 0, 1, 1], [], []>} : vector<2x256xbf16>, vector<256x128xbf16>, vector<2x128xf32> -> vector<2x128xf32>
    %84 = arith.addf %76, %83 : vector<2x128xf32>
    %c0_77 = arith.constant 0 : index
    %c0_78 = arith.constant 0 : index
    %85 = vector.load %arg10[%c0_77, %c0_78] : memref<1x128xf32, #tpu.memory_space<vmem>>, vector<1x128xf32>
    %86 = vector.broadcast %85 : vector<1x128xf32> to vector<2x128xf32>
    %87 = arith.addf %84, %86 : vector<2x128xf32>
    %cst_79 = arith.constant 2.000000e-01 : f32
    %88 = vector.broadcast %cst_79 : f32 to vector<2x128xf32>
    %89 = arith.mulf %88, %87 : vector<2x128xf32>
    %90 = arith.maximumf %87, %89 : vector<2x128xf32>
    %91 = arith.truncf %90 : vector<2x128xf32> to vector<2x128xbf16>
    %c0_80 = arith.constant 0 : index
    %c0_81 = arith.constant 0 : index
    %c0_82 = arith.constant 0 : index
    %92 = vector.load %arg11[%c0_80, %c0_81, %c0_82] : memref<3x1x2xbf16, #tpu.memory_space<vmem>>, vector<1x1x2xbf16>
    %93 = vector.shape_cast %92 : vector<1x1x2xbf16> to vector<1x2xbf16>
    %cst_83 = arith.constant dense<0.000000e+00> : vector<1x128xf32>
    %94 = tpu.matmul %93, %91, %cst_83 {dimension_numbers = #tpu.dot_dimension_numbers<[1], [0], [0], [1], [0, 0, 1, 1], [], []>} : vector<1x2xbf16>, vector<2x128xbf16>, vector<1x128xf32> -> vector<1x128xf32>
    %95 = arith.truncf %94 : vector<1x128xf32> to vector<1x128xbf16>
    %c0_84 = arith.constant 0 : index
    %c0_85 = arith.constant 0 : index
    %c0_86 = arith.constant 0 : index
    %96 = vector.load %arg12[%c0_84, %c0_85, %c0_86] : memref<3x128x64xbf16, #tpu.memory_space<vmem>>, vector<1x128x64xbf16>
    %97 = vector.shape_cast %96 : vector<1x128x64xbf16> to vector<128x64xbf16>
    %cst_87 = arith.constant dense<0.000000e+00> : vector<1x64xf32>
    %98 = tpu.matmul %95, %97, %cst_87 {dimension_numbers = #tpu.dot_dimension_numbers<[1], [0], [0], [1], [0, 0, 1, 1], [], []>} : vector<1x128xbf16>, vector<128x64xbf16>, vector<1x64xf32> -> vector<1x64xf32>
    %c1_88 = arith.constant 1 : index
    %c0_89 = arith.constant 0 : index
    %c0_90 = arith.constant 0 : index
    %99 = vector.load %arg11[%c1_88, %c0_89, %c0_90] : memref<3x1x2xbf16, #tpu.memory_space<vmem>>, vector<1x1x2xbf16>
    %100 = vector.shape_cast %99 : vector<1x1x2xbf16> to vector<1x2xbf16>
    %cst_91 = arith.constant dense<0.000000e+00> : vector<1x128xf32>
    %101 = tpu.matmul %100, %91, %cst_91 {dimension_numbers = #tpu.dot_dimension_numbers<[1], [0], [0], [1], [0, 0, 1, 1], [], []>} : vector<1x2xbf16>, vector<2x128xbf16>, vector<1x128xf32> -> vector<1x128xf32>
    %102 = arith.truncf %101 : vector<1x128xf32> to vector<1x128xbf16>
    %c1_92 = arith.constant 1 : index
    %c0_93 = arith.constant 0 : index
    %c0_94 = arith.constant 0 : index
    %103 = vector.load %arg12[%c1_92, %c0_93, %c0_94] : memref<3x128x64xbf16, #tpu.memory_space<vmem>>, vector<1x128x64xbf16>
    %104 = vector.shape_cast %103 : vector<1x128x64xbf16> to vector<128x64xbf16>
    %cst_95 = arith.constant dense<0.000000e+00> : vector<1x64xf32>
    %105 = tpu.matmul %102, %104, %cst_95 {dimension_numbers = #tpu.dot_dimension_numbers<[1], [0], [0], [1], [0, 0, 1, 1], [], []>} : vector<1x128xbf16>, vector<128x64xbf16>, vector<1x64xf32> -> vector<1x64xf32>
    %106 = arith.addf %98, %105 : vector<1x64xf32>
    %c2_96 = arith.constant 2 : index
    %c0_97 = arith.constant 0 : index
    %c0_98 = arith.constant 0 : index
    %107 = vector.load %arg11[%c2_96, %c0_97, %c0_98] : memref<3x1x2xbf16, #tpu.memory_space<vmem>>, vector<1x1x2xbf16>
    %108 = vector.shape_cast %107 : vector<1x1x2xbf16> to vector<1x2xbf16>
    %cst_99 = arith.constant dense<0.000000e+00> : vector<1x128xf32>
    %109 = tpu.matmul %108, %91, %cst_99 {dimension_numbers = #tpu.dot_dimension_numbers<[1], [0], [0], [1], [0, 0, 1, 1], [], []>} : vector<1x2xbf16>, vector<2x128xbf16>, vector<1x128xf32> -> vector<1x128xf32>
    %110 = arith.truncf %109 : vector<1x128xf32> to vector<1x128xbf16>
    %c2_100 = arith.constant 2 : index
    %c0_101 = arith.constant 0 : index
    %c0_102 = arith.constant 0 : index
    %111 = vector.load %arg12[%c2_100, %c0_101, %c0_102] : memref<3x128x64xbf16, #tpu.memory_space<vmem>>, vector<1x128x64xbf16>
    %112 = vector.shape_cast %111 : vector<1x128x64xbf16> to vector<128x64xbf16>
    %cst_103 = arith.constant dense<0.000000e+00> : vector<1x64xf32>
    %113 = tpu.matmul %110, %112, %cst_103 {dimension_numbers = #tpu.dot_dimension_numbers<[1], [0], [0], [1], [0, 0, 1, 1], [], []>} : vector<1x128xbf16>, vector<128x64xbf16>, vector<1x64xf32> -> vector<1x64xf32>
    %114 = arith.addf %106, %113 : vector<1x64xf32>
    %c0_104 = arith.constant 0 : index
    %c0_105 = arith.constant 0 : index
    %115 = vector.load %arg13[%c0_104, %c0_105] : memref<1x64xf32, #tpu.memory_space<vmem>>, vector<1x64xf32>
    %116 = arith.addf %114, %115 : vector<1x64xf32>
    %cst_106 = arith.constant 2.000000e-01 : f32
    %117 = vector.broadcast %cst_106 : f32 to vector<1x64xf32>
    %118 = arith.mulf %117, %116 : vector<1x64xf32>
    %119 = arith.maximumf %116, %118 : vector<1x64xf32>
    %c0_107 = arith.constant 0 : index
    %c0_108 = arith.constant 0 : index
    %c0_109 = arith.constant 0 : index
    %120 = vector.load %arg14[%c0_107, %c0_108, %c0_109] : memref<1x1x64xf32, #tpu.memory_space<vmem>>, vector<1x1x64xf32>
    %121 = vector.shape_cast %120 : vector<1x1x64xf32> to vector<1x64xf32>
    %122 = vector.shape_cast %119 : vector<1x64xf32> to vector<1x1x64xf32>
    tpu.vector_store %arg14[%c0_107, %c0_108, %c0_109], %122 {strides = array<i32>} : memref<1x1x64xf32, #tpu.memory_space<vmem>>, vector<1x1x64xf32>,
    return
  }
  func.func @transform_0(%arg0: i32) -> (i32, i32, i32) {
    %c0_i32 = arith.constant 0 : i32
    %c0_i32_0 = arith.constant 0 : i32
    %c0_i32_1 = arith.constant 0 : i32
    return %arg0, %c0_i32, %c0_i32_0 : i32, i32, i32
  }
  func.func @transform_1(%arg0: i32) -> (i32, i32, i32) {
    %c0_i32 = arith.constant 0 : i32
    %c0_i32_0 = arith.constant 0 : i32
    %c0_i32_1 = arith.constant 0 : i32
    %c0_i32_2 = arith.constant 0 : i32
    return %c0_i32, %c0_i32_0, %c0_i32_1 : i32, i32, i32
  }
  func.func @transform_2(%arg0: i32) -> (i32, i32, i32) {
    %c0_i32 = arith.constant 0 : i32
    %c0_i32_0 = arith.constant 0 : i32
    %c0_i32_1 = arith.constant 0 : i32
    %c0_i32_2 = arith.constant 0 : i32
    return %c0_i32, %c0_i32_0, %c0_i32_1 : i32, i32, i32
  }
  func.func @transform_3(%arg0: i32) -> (i32, i32) {
    %c0_i32 = arith.constant 0 : i32
    %c0_i32_0 = arith.constant 0 : i32
    %c0_i32_1 = arith.constant 0 : i32
    return %c0_i32, %c0_i32_0 : i32, i32
  }
  func.func @transform_4(%arg0: i32) -> (i32, i32, i32) {
    %c0_i32 = arith.constant 0 : i32
    %c0_i32_0 = arith.constant 0 : i32
    %c0_i32_1 = arith.constant 0 : i32
    %c0_i32_2 = arith.constant 0 : i32
    return %c0_i32, %c0_i32_0, %c0_i32_1 : i32, i32, i32
  }
  func.func @transform_5(%arg0: i32) -> (i32, i32, i32) {
    %c0_i32 = arith.constant 0 : i32
    %c0_i32_0 = arith.constant 0 : i32
    %c0_i32_1 = arith.constant 0 : i32
    %c0_i32_2 = arith.constant 0 : i32
    return %c0_i32, %c0_i32_0, %c0_i32_1 : i32, i32, i32
  }
  func.func @transform_6(%arg0: i32) -> (i32, i32) {
    %c0_i32 = arith.constant 0 : i32
    %c0_i32_0 = arith.constant 0 : i32
    %c0_i32_1 = arith.constant 0 : i32
    return %c0_i32, %c0_i32_0 : i32, i32
  }
  func.func @transform_7(%arg0: i32) -> (i32, i32, i32) {
    %c0_i32 = arith.constant 0 : i32
    %c0_i32_0 = arith.constant 0 : i32
    %c0_i32_1 = arith.constant 0 : i32
    %c0_i32_2 = arith.constant 0 : i32
    return %c0_i32, %c0_i32_0, %c0_i32_1 : i32, i32, i32
  }
  func.func @transform_8(%arg0: i32) -> (i32, i32, i32) {
    %c0_i32 = arith.constant 0 : i32
    %c0_i32_0 = arith.constant 0 : i32
    %c0_i32_1 = arith.constant 0 : i32
    %c0_i32_2 = arith.constant 0 : i32
    return %c0_i32, %c0_i32_0, %c0_i32_1 : i32, i32, i32
  }
  func.func @transform_9(%arg0: i32) -> (i32, i32) {
    %c0_i32 = arith.constant 0 : i32
    %c0_i32_0 = arith.constant 0 : i32
    %c0_i32_1 = arith.constant 0 : i32
    return %c0_i32, %c0_i32_0 : i32, i32
  }
  func.func @transform_10(%arg0: i32) -> (i32, i32, i32) {
    %c0_i32 = arith.constant 0 : i32
    %c0_i32_0 = arith.constant 0 : i32
    %c0_i32_1 = arith.constant 0 : i32
    %c0_i32_2 = arith.constant 0 : i32
    return %c0_i32, %c0_i32_0, %c0_i32_1 : i32, i32, i32
  }
  func.func @transform_11(%arg0: i32) -> (i32, i32, i32) {
    %c0_i32 = arith.constant 0 : i32
    %c0_i32_0 = arith.constant 0 : i32
    %c0_i32_1 = arith.constant 0 : i32
    %c0_i32_2 = arith.constant 0 : i32
    return %c0_i32, %c0_i32_0, %c0_i32_1 : i32, i32, i32
  }
  func.func @transform_12(%arg0: i32) -> (i32, i32) {
    %c0_i32 = arith.constant 0 : i32
    %c0_i32_0 = arith.constant 0 : i32
    %c0_i32_1 = arith.constant 0 : i32
    return %c0_i32, %c0_i32_0 : i32, i32
  }
  func.func @transform_13(%arg0: i32) -> (i32, i32, i32) {
    %c0_i32 = arith.constant 0 : i32
    %c0_i32_0 = arith.constant 0 : i32
    %c0_i32_1 = arith.constant 0 : i32
    return %arg0, %c0_i32, %c0_i32_0 : i32, i32, i32
  }
}

</mosaic_0001>

<llo_original>
// kernel: tile.19
$region0: #{tile.19}
  #allocation0 [shape = 's32[1]{0}', space=sflag, size = 0x4, scoped, tag = 'scoped memory for tile.19']
  %s0 = inlined_call_operand.vmem [shape: f32[32], index: 0, kind: input, shape index: {}]
  %s1 = inlined_call_operand.vmem [shape: f32[8,32], index: 1, kind: output, shape index: {}]
  // Predicated region
  $region2: #{tile.19} parent=0 // pred_check
    _
  $region3: #{tile.19} parent=0 // pred_check_branch
    %3 = sbr.rel (0) target = $region5
  $region4: #{tile.19} parent=0 // pred_region
    _
  $region5: #{tile.19} parent=0 // pred_fallthru
    _
  %v4 = vld [vmem:[%s0] ss:$0 sm:$0xff]
  %5 = vst [vmem:[%s1] sm:$0xff] %v4

// kernel: tile.20
$region0: #{tile.20}
  %s0 = inlined_call_operand.vmem [shape: f32[8,32], index: 0, kind: input, shape index: {}]
  %s1 = inlined_call_operand.vmem [shape: f32[1,256], index: 1, kind: output, shape index: {}]
  $region1: #{tile.20} parent=0
    #allocation0 [shape = 'u8[8192]{0}', space=vmem, size = 0x2000, scoped, tag = 'scoped mem for output reshape']
    %s2 = smov 3
    %v3 = vld [vmem:[%s0] ss:$4 sm:%s2]
    %vm4 = vcmask 261120
    %5 = vst.msk [vmem:[#allocation0] ss:$8 sm:$0x3] %vm4, %v3
    %s6 = scalar_lea.vmem %s0, 3
    %s7 = smov 3
    %v8 = vld [vmem:[%s6] ss:$4 sm:%s7]
    %9 = vrot.lane.b32.xlu0 %v8, 96
    %v10 = vpop.permute.xlu0 %9
    %vm11 = vcmask 1048320
    %12 = vst.msk [vmem:[#allocation0] ss:$8 sm:$0x3] %vm11, %v10
    %s13 = scalar_lea.vmem %s0, 2
    %s14 = smov 3
    %v15 = vld [vmem:[%s13] ss:$4 sm:%s14]
    %16 = vrot.lane.b32.xlu0 %v15, 64
    %v17 = vpop.permute.xlu0 %16
    %vm18 = vcmask 785920
    %19 = vst.msk [vmem:[#allocation0] ss:$8 sm:$0x3] %vm18, %v17
    %s20 = scalar_lea.vmem %s0, 1
    %s21 = smov 3
    %v22 = vld [vmem:[%s20] ss:$4 sm:%s21]
    %23 = vrot.lane.b32.xlu0 %v22, 32
    %v24 = vpop.permute.xlu0 %23
    %vm25 = vcmask 523520
    %26 = vst.msk [vmem:[#allocation0] ss:$8 sm:$0x3] %vm25, %v24
    %s28 = ssub.s32 2, 1
    %v29 = vld [vmem:[#allocation0] sm:%s28]
    %s31 = ssub.s32 2, 1
    %32 = vst [vmem:[%s1] sm:%s31] %v29
    %s33 = scalar_lea.vmem [#allocation0], 8
    %v34 = vld [vmem:[%s33] sm:%s28]
    %s36 = ssub.s32 2, 1
    %s37 = scalar_lea.vmem %s1, 1
    %38 = vst [vmem:[%s37] sm:%s36] %v34

// kernel: tile.24
$region0: #{tile.24}
  #allocation0 [shape = 's32[1]{0}', space=sflag, size = 0x4, scoped, tag = 'scoped memory for tile.24']
  %s0 = inlined_call_operand.vmem [shape: f32[64], index: 0, kind: input, shape index: {}]
  %s1 = inlined_call_operand.vmem [shape: f32[4,64], index: 1, kind: output, shape index: {}]
  // Predicated region
  $region2: #{tile.24} parent=0 // pred_check
    _
  $region3: #{tile.24} parent=0 // pred_check_branch
    %3 = sbr.rel (0) target = $region5
  $region4: #{tile.24} parent=0 // pred_region
    _
  $region5: #{tile.24} parent=0 // pred_fallthru
    _
  %v4 = vld [vmem:[%s0] ss:$0 sm:$0xff]
  %5 = vst [vmem:[%s1] sm:$0xf] %v4

// kernel: tile.25
$region0: #{tile.25}
  %s0 = inlined_call_operand.vmem [shape: f32[4,64], index: 0, kind: input, shape index: {}]
  %s1 = inlined_call_operand.vmem [shape: f32[1,256], index: 1, kind: output, shape index: {}]
  $region1: #{tile.25} parent=0
    #allocation0 [shape = 'u8[8192]{0}', space=vmem, size = 0x2000, scoped, tag = 'scoped mem for output reshape']
    #allocation1 [shape = 'u8[4096]{0}', space=vmem, size = 0x1000, scoped, tag = 'scoped mem for input reshape']
    %s3 = ssub.s32 16, 1
    %v4 = vld [vmem:[%s0] sm:%s3]
    %5 = vst [vmem:[#allocation1] sm:%s3] %v4
    %s6 = smov 3
    %v7 = vld [vmem:[#allocation1] ss:$2 sm:%s6]
    %vm8 = vcmask 523264
    %9 = vst.msk [vmem:[#allocation0] ss:$8 sm:$0x3] %vm8, %v7
    %s10 = scalar_lea.vmem [#allocation1], 1
    %s11 = smov 3
    %v12 = vld [vmem:[%s10] ss:$2 sm:%s11]
    %13 = vrot.lane.b32.xlu0 %v12, 64
    %v14 = vpop.permute.xlu0 %13
    %vm15 = vcmask 1048064
    %16 = vst.msk [vmem:[#allocation0] ss:$8 sm:$0x3] %vm15, %v14
    %s18 = ssub.s32 2, 1
    %v19 = vld [vmem:[#allocation0] sm:%s18]
    %s21 = ssub.s32 2, 1
    %22 = vst [vmem:[%s1] sm:%s21] %v19
    %s23 = scalar_lea.vmem [#allocation0], 8
    %v24 = vld [vmem:[%s23] sm:%s18]
    %s26 = ssub.s32 2, 1
    %s27 = scalar_lea.vmem %s1, 1
    %28 = vst [vmem:[%s27] sm:%s26] %v24

// kernel: tile.29
$region0: #{tile.29}
  #allocation0 [shape = 's32[1]{0}', space=sflag, size = 0x4, scoped, tag = 'scoped memory for tile.29']
  %s0 = inlined_call_operand.vmem [shape: f32[64], index: 0, kind: input, shape index: {}]
  %s1 = inlined_call_operand.vmem [shape: f32[2,64], index: 1, kind: output, shape index: {}]
  // Predicated region
  $region2: #{tile.29} parent=0 // pred_check
    _
  $region3: #{tile.29} parent=0 // pred_check_branch
    %3 = sbr.rel (0) target = $region5
  $region4: #{tile.29} parent=0 // pred_region
    _
  $region5: #{tile.29} parent=0 // pred_fallthru
    _
  %v4 = vld [vmem:[%s0] ss:$0 sm:$0xff]
  %5 = vst [vmem:[%s1] sm:$0x3] %v4

// kernel: tile.30
$region0: #{tile.30}
  %s0 = inlined_call_operand.vmem [shape: f32[2,64], index: 0, kind: input, shape index: {}]
  %s1 = inlined_call_operand.vmem [shape: f32[1,128], index: 1, kind: output, shape index: {}]
  $region1: #{tile.30} parent=0
    #allocation0 [shape = 'u8[4096]{0}', space=vmem, size = 0x1000, scoped, tag = 'scoped mem for output reshape']
    #allocation1 [shape = 'u8[4096]{0}', space=vmem, size = 0x1000, scoped, tag = 'scoped mem for input reshape']
    %s3 = ssub.s32 4, 1
    %v4 = vld [vmem:[%s0] sm:%s3]
    %5 = vst [vmem:[#allocation1] sm:%s3] %v4
    %v6 = vld [vmem:[#allocation1] sm:$0x1]
    %vm7 = vcmask 523264
    %8 = vst.msk [vmem:[#allocation0] sm:$0x1] %vm7, %v6
    %s9 = scalar_lea.vmem [#allocation1], 1
    %v10 = vld [vmem:[%s9] sm:$0x1]
    %11 = vrot.lane.b32.xlu0 %v10, 64
    %v12 = vpop.permute.xlu0 %11
    %vm13 = vcmask 1048064
    %14 = vst.msk [vmem:[#allocation0] sm:$0x1] %vm13, %v12
    %s16 = ssub.s32 2, 1
    %v17 = vld [vmem:[#allocation0] sm:%s16]
    %s19 = ssub.s32 2, 1
    %20 = vst [vmem:[%s1] sm:%s19] %v17

// kernel: encoder_forward.1
$region0: #{encoder_forward.1}
  #allocation0 [shape = 'u32[]', space=smem, size = 0x4, offset = 0x4, fixed_abs, tag = 'smem constant byte address 0x4 - core index']
  #allocation1 [shape = 'u32[72,128]{1,0:T(1,128)}', space=vmem, size = 0x9000, scoped, tag = 'internal scratch']
  %s0 = inlined_call_operand.vmem [shape: bf16[2,16,16], index: 0, kind: input, shape index: {}]
  %s1 = inlined_call_operand.vmem [shape: bf16[3,8,16], index: 1, kind: input, shape index: {}]
  %s2 = inlined_call_operand.vmem [shape: bf16[3,16,256], index: 2, kind: input, shape index: {}]
  %s3 = inlined_call_operand.vmem [shape: f32[1,256], index: 3, kind: input, shape index: {}]
  %s4 = inlined_call_operand.vmem [shape: bf16[3,4,8], index: 4, kind: input, shape index: {}]
  %s5 = inlined_call_operand.vmem [shape: bf16[3,256,256], index: 5, kind: input, shape index: {}]
  %s6 = inlined_call_operand.vmem [shape: f32[1,256], index: 6, kind: input, shape index: {}]
  %s7 = inlined_call_operand.vmem [shape: bf16[3,2,4], index: 7, kind: input, shape index: {}]
  %s8 = inlined_call_operand.vmem [shape: bf16[3,256,128], index: 8, kind: input, shape index: {}]
  %s9 = inlined_call_operand.vmem [shape: f32[1,128], index: 9, kind: input, shape index: {}]
  %s10 = inlined_call_operand.vmem [shape: bf16[3,1,2], index: 10, kind: input, shape index: {}]
  %s11 = inlined_call_operand.vmem [shape: bf16[3,128,64], index: 11, kind: input, shape index: {}]
  %s12 = inlined_call_operand.vmem [shape: f32[1,64], index: 12, kind: input, shape index: {}]
  %s13 = inlined_call_operand.hbm [shape: f32[2,1,64], index: 13, kind: output, shape index: {}]
  %s14 = sld [smem:[#allocation0]]
  $region85: #{encoder_forward.1} parent=0
    _
  %s16 = ssub.s32 1, %s14
  %s17 = scalar_select 0, %s16, %s14
  $region1: #{encoder_forward.1} parent=0
    #allocation2 [shape = 'u8[1024]{0}', space=vmem, size = 0x400, scoped, tag = 'output window, operand 0']
    #allocation3 [shape = 's32[2]{0}', space=sflag, size = 0x8, scoped, tag = 'scoped memory for encoder_forward.1']
    %18 = vsyncpa [#allocation3], 0
    %s19 = scalar_lea.sflag [#allocation3], 1
    %20 = vsyncpa %s19, 0
    loop: start=0, step=1, limit=4
    $region2: #{encoder_forward.1} parent=1 // loop_pre_header
      _
    $region3: #{encoder_forward.1} parent=1 // loop_header
      %s22 = sphi 0, %s26
      %p23 = scmp.ge.s32.totalorder %s22, 4
      %s32 = sphi 0, %s34
      %s35 = sphi 0, %s32
      %s36 = sphi 0, %s35
      %s52 = sphi 0, %s36
      %s56 = sphi 0, %s56
      %s58 = sphi 0, %s56
      %s59 = sphi 0, %s58
      %s73 = sphi 0, %s59
      %s77 = sphi 0, %s77
      %s79 = sphi 0, %s77
      %s80 = sphi 0, %s79
      %s94 = sphi 0, %s80
      %s98 = sphi 0, %s98
      %s100 = sphi 0, %s98
      %s101 = sphi 0, %s100
      %s115 = sphi 0, %s101
      %s119 = sphi 0, %s119
      %s121 = sphi 0, %s119
      %s122 = sphi 0, %s121
      %s136 = sphi 0, %s122
      %s140 = sphi 0, %s140
      %s142 = sphi 0, %s140
      %s143 = sphi 0, %s142
      %s157 = sphi 0, %s143
      %s161 = sphi 0, %s161
      %s163 = sphi 0, %s161
      %s164 = sphi 0, %s163
      %s178 = sphi 0, %s164
      %s182 = sphi 0, %s182
      %s184 = sphi 0, %s182
      %s185 = sphi 0, %s184
      %s199 = sphi 0, %s185
      %s203 = sphi 0, %s203
      %s205 = sphi 0, %s203
      %s206 = sphi 0, %s205
      %s220 = sphi 0, %s206
      %s224 = sphi 0, %s224
      %s226 = sphi 0, %s224
      %s227 = sphi 0, %s226
      %s241 = sphi 0, %s227
      %s245 = sphi 0, %s245
      %s247 = sphi 0, %s245
      %s248 = sphi 0, %s247
      %s262 = sphi 0, %s248
      %s266 = sphi 0, %s266
      %s268 = sphi 0, %s266
      %s269 = sphi 0, %s268
      %s283 = sphi 0, %s269
      %s287 = sphi 0, %s287
      %s289 = sphi 0, %s287
      %s290 = sphi 0, %s289
      %s304 = sphi 0, %s290
      %s310 = sphi 0, %s312
      %s313 = sphi 0, %s310
      %s314 = sphi 0, %s313
      %s330 = sphi 0, %s314
    $region4: #{encoder_forward.1} parent=1 // loop_header_branch
      %25 = sbr.rel (%p23) target = $region8
    $region5: #{encoder_forward.1} parent=1 // loop_body
      %s27 = ssub.s32 %s22, 1
      %s28 = ssub.s32 %s22, 2
      %s29 = sadd.s32 %s22, 1
      %s30 = ssub.s32 %s22, %s29
      %p31 = scmp.eq.s32.totalorder %s30, 0
      %s33 = sadd.s32 %s32, 1
      %s34 = scalar_select %p31, %s32, %s33
      %p37 = pneg %p31
      %p38 = scmp.eq.s32.totalorder %s22, 1
      %p39 = por %p37, %p38
      %p40 = scmp.ne.s32.totalorder %s32, %s35
      %p41 = scmp.eq.s32.totalorder %s22, 0
      %p42 = por %p40, %p41
      %p43 = scmp.ne.s32.totalorder %s32, %s35
      %p44 = scmp.eq.s32.totalorder %s27, 1
      %p45 = por %p43, %p44
      %p46 = scmp.ne.s32.totalorder %s35, %s36
      %p47 = scmp.eq.s32.totalorder %s27, 0
      %p48 = por %p46, %p47
      %p49 = scmp.ne.s32.totalorder %s35, %s36
      %p50 = scmp.eq.s32.totalorder %s28, 1
      %p51 = por %p49, %p50
      %p53 = scmp.ne.s32.totalorder %s36, %s52
      %p54 = scmp.eq.s32.totalorder %s28, 0
      %p55 = por %p53, %p54
      %s57 = sadd.s32 %s56, 1
      %p60 = scmp.eq.s32.totalorder %s22, 1
      %p61 = scmp.ne.s32.totalorder %s56, %s58
      %p62 = scmp.eq.s32.totalorder %s22, 0
      %p63 = por %p61, %p62
      %p64 = scmp.ne.s32.totalorder %s56, %s58
      %p65 = scmp.eq.s32.totalorder %s27, 1
      %p66 = por %p64, %p65
      %p67 = scmp.ne.s32.totalorder %s58, %s59
      %p68 = scmp.eq.s32.totalorder %s27, 0
      %p69 = por %p67, %p68
      %p70 = scmp.ne.s32.totalorder %s58, %s59
      %p71 = scmp.eq.s32.totalorder %s28, 1
      %p72 = por %p70, %p71
      %p74 = scmp.ne.s32.totalorder %s59, %s73
      %p75 = scmp.eq.s32.totalorder %s28, 0
      %p76 = por %p74, %p75
      %s78 = sadd.s32 %s77, 1
      %p81 = scmp.eq.s32.totalorder %s22, 1
      %p82 = scmp.ne.s32.totalorder %s77, %s79
      %p83 = scmp.eq.s32.totalorder %s22, 0
      %p84 = por %p82, %p83
      %p85 = scmp.ne.s32.totalorder %s77, %s79
      %p86 = scmp.eq.s32.totalorder %s27, 1
      %p87 = por %p85, %p86
      %p88 = scmp.ne.s32.totalorder %s79, %s80
      %p89 = scmp.eq.s32.totalorder %s27, 0
      %p90 = por %p88, %p89
      %p91 = scmp.ne.s32.totalorder %s79, %s80
      %p92 = scmp.eq.s32.totalorder %s28, 1
      %p93 = por %p91, %p92
      %p95 = scmp.ne.s32.totalorder %s80, %s94
      %p96 = scmp.eq.s32.totalorder %s28, 0
      %p97 = por %p95, %p96
      %s99 = sadd.s32 %s98, 1
      %p102 = scmp.eq.s32.totalorder %s22, 1
      %p103 = scmp.ne.s32.totalorder %s98, %s100
      %p104 = scmp.eq.s32.totalorder %s22, 0
      %p105 = por %p103, %p104
      %p106 = scmp.ne.s32.totalorder %s98, %s100
      %p107 = scmp.eq.s32.totalorder %s27, 1
      %p108 = por %p106, %p107
      %p109 = scmp.ne.s32.totalorder %s100, %s101
      %p110 = scmp.eq.s32.totalorder %s27, 0
      %p111 = por %p109, %p110
      %p112 = scmp.ne.s32.totalorder %s100, %s101
      %p113 = scmp.eq.s32.totalorder %s28, 1
      %p114 = por %p112, %p113
      %p116 = scmp.ne.s32.totalorder %s101, %s115
      %p117 = scmp.eq.s32.totalorder %s28, 0
      %p118 = por %p116, %p117
      %s120 = sadd.s32 %s119, 1
      %p123 = scmp.eq.s32.totalorder %s22, 1
      %p124 = scmp.ne.s32.totalorder %s119, %s121
      %p125 = scmp.eq.s32.totalorder %s22, 0
      %p126 = por %p124, %p125
      %p127 = scmp.ne.s32.totalorder %s119, %s121
      %p128 = scmp.eq.s32.totalorder %s27, 1
      %p129 = por %p127, %p128
      %p130 = scmp.ne.s32.totalorder %s121, %s122
      %p131 = scmp.eq.s32.totalorder %s27, 0
      %p132 = por %p130, %p131
      %p133 = scmp.ne.s32.totalorder %s121, %s122
      %p134 = scmp.eq.s32.totalorder %s28, 1
      %p135 = por %p133, %p134
      %p137 = scmp.ne.s32.totalorder %s122, %s136
      %p138 = scmp.eq.s32.totalorder %s28, 0
      %p139 = por %p137, %p138
      %s141 = sadd.s32 %s140, 1
      %p144 = scmp.eq.s32.totalorder %s22, 1
      %p145 = scmp.ne.s32.totalorder %s140, %s142
      %p146 = scmp.eq.s32.totalorder %s22, 0
      %p147 = por %p145, %p146
      %p148 = scmp.ne.s32.totalorder %s140, %s142
      %p149 = scmp.eq.s32.totalorder %s27, 1
      %p150 = por %p148, %p149
      %p151 = scmp.ne.s32.totalorder %s142, %s143
      %p152 = scmp.eq.s32.totalorder %s27, 0
      %p153 = por %p151, %p152
      %p154 = scmp.ne.s32.totalorder %s142, %s143
      %p155 = scmp.eq.s32.totalorder %s28, 1
      %p156 = por %p154, %p155
      %p158 = scmp.ne.s32.totalorder %s143, %s157
      %p159 = scmp.eq.s32.totalorder %s28, 0
      %p160 = por %p158, %p159
      %s162 = sadd.s32 %s161, 1
      %p165 = scmp.eq.s32.totalorder %s22, 1
      %p166 = scmp.ne.s32.totalorder %s161, %s163
      %p167 = scmp.eq.s32.totalorder %s22, 0
      %p168 = por %p166, %p167
      %p169 = scmp.ne.s32.totalorder %s161, %s163
      %p170 = scmp.eq.s32.totalorder %s27, 1
      %p171 = por %p169, %p170
      %p172 = scmp.ne.s32.totalorder %s163, %s164
      %p173 = scmp.eq.s32.totalorder %s27, 0
      %p174 = por %p172, %p173
      %p175 = scmp.ne.s32.totalorder %s163, %s164
      %p176 = scmp.eq.s32.totalorder %s28, 1
      %p177 = por %p175, %p176
      %p179 = scmp.ne.s32.totalorder %s164, %s178
      %p180 = scmp.eq.s32.totalorder %s28, 0
      %p181 = por %p179, %p180
      %s183 = sadd.s32 %s182, 1
      %p186 = scmp.eq.s32.totalorder %s22, 1
      %p187 = scmp.ne.s32.totalorder %s182, %s184
      %p188 = scmp.eq.s32.totalorder %s22, 0
      %p189 = por %p187, %p188
      %p190 = scmp.ne.s32.totalorder %s182, %s184
      %p191 = scmp.eq.s32.totalorder %s27, 1
      %p192 = por %p190, %p191
      %p193 = scmp.ne.s32.totalorder %s184, %s185
      %p194 = scmp.eq.s32.totalorder %s27, 0
      %p195 = por %p193, %p194
      %p196 = scmp.ne.s32.totalorder %s184, %s185
      %p197 = scmp.eq.s32.totalorder %s28, 1
      %p198 = por %p196, %p197
      %p200 = scmp.ne.s32.totalorder %s185, %s199
      %p201 = scmp.eq.s32.totalorder %s28, 0
      %p202 = por %p200, %p201
      %s204 = sadd.s32 %s203, 1
      %p207 = scmp.eq.s32.totalorder %s22, 1
      %p208 = scmp.ne.s32.totalorder %s203, %s205
      %p209 = scmp.eq.s32.totalorder %s22, 0
      %p210 = por %p208, %p209
      %p211 = scmp.ne.s32.totalorder %s203, %s205
      %p212 = scmp.eq.s32.totalorder %s27, 1
      %p213 = por %p211, %p212
      %p214 = scmp.ne.s32.totalorder %s205, %s206
      %p215 = scmp.eq.s32.totalorder %s27, 0
      %p216 = por %p214, %p215
      %p217 = scmp.ne.s32.totalorder %s205, %s206
      %p218 = scmp.eq.s32.totalorder %s28, 1
      %p219 = por %p217, %p218
      %p221 = scmp.ne.s32.totalorder %s206, %s220
      %p222 = scmp.eq.s32.totalorder %s28, 0
      %p223 = por %p221, %p222
      %s225 = sadd.s32 %s224, 1
      %p228 = scmp.eq.s32.totalorder %s22, 1
      %p229 = scmp.ne.s32.totalorder %s224, %s226
      %p230 = scmp.eq.s32.totalorder %s22, 0
      %p231 = por %p229, %p230
      %p232 = scmp.ne.s32.totalorder %s224, %s226
      %p233 = scmp.eq.s32.totalorder %s27, 1
      %p234 = por %p232, %p233
      %p235 = scmp.ne.s32.totalorder %s226, %s227
      %p236 = scmp.eq.s32.totalorder %s27, 0
      %p237 = por %p235, %p236
      %p238 = scmp.ne.s32.totalorder %s226, %s227
      %p239 = scmp.eq.s32.totalorder %s28, 1
      %p240 = por %p238, %p239
      %p242 = scmp.ne.s32.totalorder %s227, %s241
      %p243 = scmp.eq.s32.totalorder %s28, 0
      %p244 = por %p242, %p243
      %s246 = sadd.s32 %s245, 1
      %p249 = scmp.eq.s32.totalorder %s22, 1
      %p250 = scmp.ne.s32.totalorder %s245, %s247
      %p251 = scmp.eq.s32.totalorder %s22, 0
      %p252 = por %p250, %p251
      %p253 = scmp.ne.s32.totalorder %s245, %s247
      %p254 = scmp.eq.s32.totalorder %s27, 1
      %p255 = por %p253, %p254
      %p256 = scmp.ne.s32.totalorder %s247, %s248
      %p257 = scmp.eq.s32.totalorder %s27, 0
      %p258 = por %p256, %p257
      %p259 = scmp.ne.s32.totalorder %s247, %s248
      %p260 = scmp.eq.s32.totalorder %s28, 1
      %p261 = por %p259, %p260
      %p263 = scmp.ne.s32.totalorder %s248, %s262
      %p264 = scmp.eq.s32.totalorder %s28, 0
      %p265 = por %p263, %p264
      %s267 = sadd.s32 %s266, 1
      %p270 = scmp.eq.s32.totalorder %s22, 1
      %p271 = scmp.ne.s32.totalorder %s266, %s268
      %p272 = scmp.eq.s32.totalorder %s22, 0
      %p273 = por %p271, %p272
      %p274 = scmp.ne.s32.totalorder %s266, %s268
      %p275 = scmp.eq.s32.totalorder %s27, 1
      %p276 = por %p274, %p275
      %p277 = scmp.ne.s32.totalorder %s268, %s269
      %p278 = scmp.eq.s32.totalorder %s27, 0
      %p279 = por %p277, %p278
      %p280 = scmp.ne.s32.totalorder %s268, %s269
      %p281 = scmp.eq.s32.totalorder %s28, 1
      %p282 = por %p280, %p281
      %p284 = scmp.ne.s32.totalorder %s269, %s283
      %p285 = scmp.eq.s32.totalorder %s28, 0
      %p286 = por %p284, %p285
      %s288 = sadd.s32 %s287, 1
      %p291 = scmp.eq.s32.totalorder %s22, 1
      %p292 = scmp.ne.s32.totalorder %s287, %s289
      %p293 = scmp.eq.s32.totalorder %s22, 0
      %p294 = por %p292, %p293
      %p295 = scmp.ne.s32.totalorder %s287, %s289
      %p296 = scmp.eq.s32.totalorder %s27, 1
      %p297 = por %p295, %p296
      %p298 = scmp.ne.s32.totalorder %s289, %s290
      %p299 = scmp.eq.s32.totalorder %s27, 0
      %p300 = por %p298, %p299
      %p301 = scmp.ne.s32.totalorder %s289, %s290
      %p302 = scmp.eq.s32.totalorder %s28, 1
      %p303 = por %p301, %p302
      %p305 = scmp.ne.s32.totalorder %s290, %s304
      %p306 = scmp.eq.s32.totalorder %s28, 0
      %p307 = por %p305, %p306
      %s308 = ssub.s32 %s22, %s29
      %p309 = scmp.eq.s32.totalorder %s308, 0
      %s311 = sadd.s32 %s310, 1
      %s312 = scalar_select %p309, %s310, %s311
      %p315 = pneg %p309
      %p316 = scmp.eq.s32.totalorder %s22, 1
      %p317 = por %p315, %p316
      %p318 = scmp.ne.s32.totalorder %s310, %s313
      %p319 = scmp.eq.s32.totalorder %s22, 0
      %p320 = por %p318, %p319
      %p321 = scmp.ne.s32.totalorder %s310, %s313
      %p322 = scmp.eq.s32.totalorder %s27, 1
      %p323 = por %p321, %p322
      %p324 = scmp.ne.s32.totalorder %s313, %s314
      %p325 = scmp.eq.s32.totalorder %s27, 0
      %p326 = por %p324, %p325
      %p327 = scmp.ne.s32.totalorder %s313, %s314
      %p328 = scmp.eq.s32.totalorder %s28, 1
      %p329 = por %p327, %p328
      %p331 = scmp.ne.s32.totalorder %s314, %s330
      %p332 = scmp.eq.s32.totalorder %s28, 0
      %p333 = por %p331, %p332
      %p334 = scmp.le.s32.totalorder 1, %s22
      %p335 = scmp.lt.s32.totalorder %s22, 3
      %p336 = pnand %p334, %p335
      %p337 = pneg %p336
      // Predicated region
      $region9: #{encoder_forward.1} parent=5 // pred_check
        _
      $region10: #{encoder_forward.1} parent=5 // pred_check_branch
        %339 = sbr.rel (%p336) target = $region12
      $region11: #{encoder_forward.1} parent=5 // pred_region
        %s340 = ssub.s32 %s22, 1
        // Predicated region
        $region13: #{encoder_forward.1} parent=11 // pred_check
          %p341 = pneg %p69
        $region14: #{encoder_forward.1} parent=11 // pred_check_branch
          %343 = sbr.rel (%p341) target = $region16
        $region15: #{encoder_forward.1} parent=11 // pred_region
          _
        $region16: #{encoder_forward.1} parent=11 // pred_fallthru
          _
        // Predicated region
        $region17: #{encoder_forward.1} parent=11 // pred_check
          %p344 = pneg %p90
        $region18: #{encoder_forward.1} parent=11 // pred_check_branch
          %346 = sbr.rel (%p344) target = $region20
        $region19: #{encoder_forward.1} parent=11 // pred_region
          _
        $region20: #{encoder_forward.1} parent=11 // pred_fallthru
          _
        // Predicated region
        $region21: #{encoder_forward.1} parent=11 // pred_check
          %p347 = pneg %p111
        $region22: #{encoder_forward.1} parent=11 // pred_check_branch
          %349 = sbr.rel (%p347) target = $region24
        $region23: #{encoder_forward.1} parent=11 // pred_region
          _
        $region24: #{encoder_forward.1} parent=11 // pred_fallthru
          _
        // Predicated region
        $region25: #{encoder_forward.1} parent=11 // pred_check
          %p350 = pneg %p132
        $region26: #{encoder_forward.1} parent=11 // pred_check_branch
          %352 = sbr.rel (%p350) target = $region28
        $region27: #{encoder_forward.1} parent=11 // pred_region
          _
        $region28: #{encoder_forward.1} parent=11 // pred_fallthru
          _
        // Predicated region
        $region29: #{encoder_forward.1} parent=11 // pred_check
          %p353 = pneg %p153
        $region30: #{encoder_forward.1} parent=11 // pred_check_branch
          %355 = sbr.rel (%p353) target = $region32
        $region31: #{encoder_forward.1} parent=11 // pred_region
          _
        $region32: #{encoder_forward.1} parent=11 // pred_fallthru
          _
        // Predicated region
        $region33: #{encoder_forward.1} parent=11 // pred_check
          %p356 = pneg %p174
        $region34: #{encoder_forward.1} parent=11 // pred_check_branch
          %358 = sbr.rel (%p356) target = $region36
        $region35: #{encoder_forward.1} parent=11 // pred_region
          _
        $region36: #{encoder_forward.1} parent=11 // pred_fallthru
          _
        // Predicated region
        $region37: #{encoder_forward.1} parent=11 // pred_check
          %p359 = pneg %p195
        $region38: #{encoder_forward.1} parent=11 // pred_check_branch
          %361 = sbr.rel (%p359) target = $region40
        $region39: #{encoder_forward.1} parent=11 // pred_region
          _
        $region40: #{encoder_forward.1} parent=11 // pred_fallthru
          _
        // Predicated region
        $region41: #{encoder_forward.1} parent=11 // pred_check
          %p362 = pneg %p216
        $region42: #{encoder_forward.1} parent=11 // pred_check_branch
          %364 = sbr.rel (%p362) target = $region44
        $region43: #{encoder_forward.1} parent=11 // pred_region
          _
        $region44: #{encoder_forward.1} parent=11 // pred_fallthru
          _
        // Predicated region
        $region45: #{encoder_forward.1} parent=11 // pred_check
          %p365 = pneg %p237
        $region46: #{encoder_forward.1} parent=11 // pred_check_branch
          %367 = sbr.rel (%p365) target = $region48
        $region47: #{encoder_forward.1} parent=11 // pred_region
          _
        $region48: #{encoder_forward.1} parent=11 // pred_fallthru
          _
        // Predicated region
        $region49: #{encoder_forward.1} parent=11 // pred_check
          %p368 = pneg %p258
        $region50: #{encoder_forward.1} parent=11 // pred_check_branch
          %370 = sbr.rel (%p368) target = $region52
        $region51: #{encoder_forward.1} parent=11 // pred_region
          _
        $region52: #{encoder_forward.1} parent=11 // pred_fallthru
          _
        // Predicated region
        $region53: #{encoder_forward.1} parent=11 // pred_check
          %p371 = pneg %p279
        $region54: #{encoder_forward.1} parent=11 // pred_check_branch
          %373 = sbr.rel (%p371) target = $region56
        $region55: #{encoder_forward.1} parent=11 // pred_region
          _
        $region56: #{encoder_forward.1} parent=11 // pred_fallthru
          _
        // Predicated region
        $region57: #{encoder_forward.1} parent=11 // pred_check
          %p374 = pneg %p300
        $region58: #{encoder_forward.1} parent=11 // pred_check_branch
          %376 = sbr.rel (%p374) target = $region60
        $region59: #{encoder_forward.1} parent=11 // pred_region
          _
        $region60: #{encoder_forward.1} parent=11 // pred_fallthru
          _
      $region12: #{encoder_forward.1} parent=5 // pred_fallthru
        _
      %p377 = scmp.lt.s32.totalorder %s22, 2
      // Predicated region
      $region61: #{encoder_forward.1} parent=5 // pred_check
        %p378 = pneg %p377
      $region62: #{encoder_forward.1} parent=5 // pred_check_branch
        %380 = sbr.rel (%p378) target = $region64
      $region63: #{encoder_forward.1} parent=5 // pred_region
        // Predicated region
        $region65: #{encoder_forward.1} parent=63 // pred_check
          %p381 = pneg %p42
        $region66: #{encoder_forward.1} parent=63 // pred_check_branch
          %383 = sbr.rel (%p381) target = $region68
        $region67: #{encoder_forward.1} parent=63 // pred_region
          %p384 = scmp.lt.s32.totalorder %s22, 1
          %s385 = scalar_select %p384, %s22, 1
          %s386 = smul.addr %s385, 2
          %s387 = smul.addr %s386, 4
          %s388 = scalar_lea.vmem %s0, %s387
        $region68: #{encoder_forward.1} parent=63 // pred_fallthru
          _
      $region64: #{encoder_forward.1} parent=5 // pred_fallthru
        _
      %p389 = scmp.le.s32.totalorder 1, %s22
      %p390 = scmp.lt.s32.totalorder %s22, 3
      %p391 = pnand %p389, %p390
      %p392 = pneg %p391
      // Predicated region
      $region69: #{encoder_forward.1} parent=5 // pred_check
        _
      $region70: #{encoder_forward.1} parent=5 // pred_check_branch
        %394 = sbr.rel (%p391) target = $region72
      $region71: #{encoder_forward.1} parent=5 // pred_region
        %s395 = ssub.s32 %s22, 1
        %p396 = scmp.lt.s32.totalorder %s27, 1
        %s397 = scalar_select %p396, %s27, 1
        %s398 = smul.addr %s397, 2
        %s399 = smul.addr %s398, 4
        %s400 = scalar_lea.vmem %s0, %s399
        %p401 = pneg %p48
        %p402 = pneg %p45
        %p403 = pneg %p69
        %p404 = pneg %p66
        %p405 = pneg %p90
        %p406 = pneg %p87
        %p407 = pneg %p111
        %p408 = pneg %p108
        %p409 = pneg %p132
        %p410 = pneg %p129
        %p411 = pneg %p153
        %p412 = pneg %p150
        %p413 = pneg %p174
        %p414 = pneg %p171
        %p415 = pneg %p195
        %p416 = pneg %p192
        %p417 = pneg %p216
        %p418 = pneg %p213
        %p419 = pneg %p237
        %p420 = pneg %p234
        %p421 = pneg %p258
        %p422 = pneg %p255
        %p423 = pneg %p279
        %p424 = pneg %p276
        %p425 = pneg %p300
        %p426 = pneg %p297
        %p427 = pneg %p326
        %p428 = pneg %p323
        %s429 = sand.u32 %s313, 1
        %s430 = scalar_lea.sflag [#allocation3], %s429
        %s431 = sand.u32 %s313, 1
        %s432 = scalar_lea.vmem [#allocation2], %s431
        %p433 = scmp.lt.s32.totalorder %s27, 1
        %s434 = scalar_select %p433, %s27, 1
        %s435 = smul.addr %s434, 2
        %s436 = smul.addr %s435, 4
        %s437 = scalar_lea.vmem %s0, %s436
        %v439 = vld [vmem:[%s437] sm:$0xf]
        %v440 = vld [vmem:[%s437 + $0x4] sm:$0xf]
        %v441 = vld [vmem:[%s1] sm:$0xf]
        %v444 = vunpack.c.l.b16 %v439
        %v445 = vunpack.c.l.b16 %v440
        %v446 = vpack.c.b16 %v445, %v444
        %vm448 = vcmask 130048
        %v450 = vsel %vm448, %v441, 0
        %452 = vmatpush.bf16.msra.mxu0 0
        %453 = vmatpush.bf16.msra.mxu0 0
        %454 = vmatpush.bf16.msra.mxu0 0
        %455 = vmatpush.bf16.msra.mxu0 0
        %456 = vmatpush.bf16.msra.mxu0 0
        %457 = vmatpush.bf16.msra.mxu0 0
        %458 = vmatpush.bf16.msra.mxu0 0
        %459 = vmatpush.bf16.msra.mxu0 %v446
        %460 = vmatmul.bf16.gmra.mxu0 %v450
        %v461 = vpop.f32.mrf.mxu0
        %v462 = vadd.f32 0.0, %v461
        %v463 = vpop.f32.mrf.mxu0
        %464 = vdwg.mxu0
        %v465 = vpack.c.bf16 %v462, %v462
        %v466 = vld [vmem:[%s2] sm:$0xff]
        %v467 = vld [vmem:[%s2 + $0x8] sm:$0xff]
        %s468 = scalar_lea.vmem %s1, 4
        %v469 = vld [vmem:[%s468] sm:$0xf]
        %v471 = vsel %vm448, %v469, 0
        %473 = vmatpush.bf16.msra.mxu0 0
        %474 = vmatpush.bf16.msra.mxu0 0
        %475 = vmatpush.bf16.msra.mxu0 0
        %476 = vmatpush.bf16.msra.mxu0 0
        %477 = vmatpush.bf16.msra.mxu0 0
        %478 = vmatpush.bf16.msra.mxu0 0
        %479 = vmatpush.bf16.msra.mxu0 0
        %480 = vmatpush.bf16.msra.mxu0 %v446
        %481 = vmatmul.bf16.gmra.mxu0 %v471
        %v482 = vpop.f32.mrf.mxu0
        %v483 = vadd.f32 0.0, %v482
        %v484 = vpop.f32.mrf.mxu0
        %485 = vdwg.mxu0
        %v486 = vpack.c.bf16 %v483, %v483
        %s487 = scalar_lea.vmem %s2, 16
        %v488 = vld [vmem:[%s487] sm:$0xff]
        %v489 = vld [vmem:[%s487 + $0x8] sm:$0xff]
        %v492 = vunpack.c.l.b16 %v488
        %v493 = vunpack.c.h.b16 %v488
        %v494 = vunpack.c.l.b16 %v489
        %v495 = vunpack.c.h.b16 %v489
        %v496 = vpack.c.b16 %v494, %v492
        %v497 = vpack.c.b16 %v495, %v493
        %v501 = vsel %vm448, %v486, 0
        %503 = vmatpush.bf16.msra.mxu0 0
        %504 = vmatpush.bf16.msra.mxu0 0
        %505 = vmatpush.bf16.msra.mxu0 0
        %506 = vmatpush.bf16.msra.mxu0 0
        %507 = vmatpush.bf16.msra.mxu0 0
        %508 = vmatpush.bf16.msra.mxu0 0
        %509 = vmatpush.bf16.msra.mxu0 0
        %510 = vmatpush.bf16.msra.mxu0 %v496
        %511 = vmatmul.bf16.gmra.mxu0 %v501
        %v512 = vpop.f32.mrf.mxu0
        %v513 = vadd.f32 0.0, %v512
        %v514 = vpop.f32.mrf.mxu0
        %515 = vdwg.mxu0
        %516 = vmatpush.bf16.msra.mxu0 0
        %517 = vmatpush.bf16.msra.mxu0 0
        %518 = vmatpush.bf16.msra.mxu0 0
        %519 = vmatpush.bf16.msra.mxu0 0
        %520 = vmatpush.bf16.msra.mxu0 0
        %521 = vmatpush.bf16.msra.mxu0 0
        %522 = vmatpush.bf16.msra.mxu0 0
        %523 = vmatpush.bf16.msra.mxu0 %v497
        %524 = vmatmul.bf16.gmra.mxu0 %v501
        %v525 = vpop.f32.mrf.mxu0
        %v526 = vadd.f32 0.0, %v525
        %v527 = vpop.f32.mrf.mxu0
        %528 = vdwg.mxu0
        %v531 = vunpack.c.l.b16 %v466
        %v532 = vunpack.c.h.b16 %v466
        %v533 = vunpack.c.l.b16 %v467
        %v534 = vunpack.c.h.b16 %v467
        %v535 = vpack.c.b16 %v533, %v531
        %v536 = vpack.c.b16 %v534, %v532
        %v540 = vsel %vm448, %v465, 0
        %542 = vmatpush.bf16.msra.mxu0 0
        %543 = vmatpush.bf16.msra.mxu0 0
        %544 = vmatpush.bf16.msra.mxu0 0
        %545 = vmatpush.bf16.msra.mxu0 0
        %546 = vmatpush.bf16.msra.mxu0 0
        %547 = vmatpush.bf16.msra.mxu0 0
        %548 = vmatpush.bf16.msra.mxu0 0
        %549 = vmatpush.bf16.msra.mxu0 %v535
        %550 = vmatmul.bf16.gmra.mxu0 %v540
        %v551 = vpop.f32.mrf.mxu0
        %v552 = vadd.f32 %v513, %v551
        %v553 = vpop.f32.mrf.mxu0
        %554 = vdwg.mxu0
        %555 = vmatpush.bf16.msra.mxu0 0
        %556 = vmatpush.bf16.msra.mxu0 0
        %557 = vmatpush.bf16.msra.mxu0 0
        %558 = vmatpush.bf16.msra.mxu0 0
        %559 = vmatpush.bf16.msra.mxu0 0
        %560 = vmatpush.bf16.msra.mxu0 0
        %561 = vmatpush.bf16.msra.mxu0 0
        %562 = vmatpush.bf16.msra.mxu0 %v536
        %563 = vmatmul.bf16.gmra.mxu0 %v540
        %v564 = vpop.f32.mrf.mxu0
        %v565 = vadd.f32 %v526, %v564
        %v566 = vpop.f32.mrf.mxu0
        %567 = vdwg.mxu0
        %s568 = scalar_lea.vmem %s1, 8
        %v569 = vld [vmem:[%s568] sm:$0xf]
        %v571 = vsel %vm448, %v569, 0
        %573 = vmatpush.bf16.msra.mxu0 0
        %574 = vmatpush.bf16.msra.mxu0 0
        %575 = vmatpush.bf16.msra.mxu0 0
        %576 = vmatpush.bf16.msra.mxu0 0
        %577 = vmatpush.bf16.msra.mxu0 0
        %578 = vmatpush.bf16.msra.mxu0 0
        %579 = vmatpush.bf16.msra.mxu0 0
        %580 = vmatpush.bf16.msra.mxu0 %v446
        %581 = vmatmul.bf16.gmra.mxu0 %v571
        %v582 = vpop.f32.mrf.mxu0
        %v583 = vadd.f32 0.0, %v582
        %v584 = vpop.f32.mrf.mxu0
        %585 = vdwg.mxu0
        %v586 = vpack.c.bf16 %v583, %v583
        %s587 = scalar_lea.vmem %s2, 32
        %v588 = vld [vmem:[%s587] sm:$0xff]
        %v589 = vld [vmem:[%s587 + $0x8] sm:$0xff]
        %v592 = vunpack.c.l.b16 %v588
        %v593 = vunpack.c.h.b16 %v588
        %v594 = vunpack.c.l.b16 %v589
        %v595 = vunpack.c.h.b16 %v589
        %v596 = vpack.c.b16 %v594, %v592
        %v597 = vpack.c.b16 %v595, %v593
        %v601 = vsel %vm448, %v586, 0
        %603 = vmatpush.bf16.msra.mxu0 0
        %604 = vmatpush.bf16.msra.mxu0 0
        %605 = vmatpush.bf16.msra.mxu0 0
        %606 = vmatpush.bf16.msra.mxu0 0
        %607 = vmatpush.bf16.msra.mxu0 0
        %608 = vmatpush.bf16.msra.mxu0 0
        %609 = vmatpush.bf16.msra.mxu0 0
        %610 = vmatpush.bf16.msra.mxu0 %v596
        %611 = vmatmul.bf16.gmra.mxu0 %v601
        %v612 = vpop.f32.mrf.mxu0
        %v613 = vadd.f32 0.0, %v612
        %v614 = vpop.f32.mrf.mxu0
        %615 = vdwg.mxu0
        %616 = vmatpush.bf16.msra.mxu0 0
        %617 = vmatpush.bf16.msra.mxu0 0
        %618 = vmatpush.bf16.msra.mxu0 0
        %619 = vmatpush.bf16.msra.mxu0 0
        %620 = vmatpush.bf16.msra.mxu0 0
        %621 = vmatpush.bf16.msra.mxu0 0
        %622 = vmatpush.bf16.msra.mxu0 0
        %623 = vmatpush.bf16.msra.mxu0 %v597
        %624 = vmatmul.bf16.gmra.mxu0 %v601
        %v625 = vpop.f32.mrf.mxu0
        %v626 = vadd.f32 0.0, %v625
        %v627 = vpop.f32.mrf.mxu0
        %628 = vdwg.mxu0
        %v629 = vadd.f32 %v552, %v613
        %v630 = vadd.f32 %v565, %v626
        %v631 = vld [vmem:[%s3] sm:$0x3]
        %v633 = vperm.slane %v631, 0
        %v634 = vperm.slane %v631, 1
        %v637 = vadd.f32 %v629, %v633
        %v638 = vadd.f32 %v630, %v634
        %v639 = vmul.f32 %v637, 0.2
        %v640 = vmul.f32 %v638, 0.2
        %v641 = vmax.f32 %v637, %v639
        %v642 = vmax.f32 %v638, %v640
        %v643 = vpack.c.bf16 %v641, %v641
        %v644 = vpack.c.bf16 %v642, %v642
        %v645 = vld [vmem:[%s4] sm:$0x3]
        %vm646 = vcmask 64512
        %v648 = vsel %vm646, %v645, 0
        %vm650 = vcmask 1043456
        %v652 = vsel %vm650, %v643, 0
        %v655 = vsel %vm650, %v644, 0
        %657 = vmatpush.bf16.msra.mxu0 0
        %658 = vmatpush.bf16.msra.mxu0 0
        %659 = vmatpush.bf16.msra.mxu0 0
        %660 = vmatpush.bf16.msra.mxu0 0
        %661 = vmatpush.bf16.msra.mxu0 0
        %662 = vmatpush.bf16.msra.mxu0 0
        %663 = vmatpush.bf16.msra.mxu0 0
        %664 = vmatpush.bf16.msra.mxu0 %v652
        %665 = vmatmul.bf16.gmra.mxu0 %v648
        %v666 = vpop.f32.mrf.mxu0
        %v667 = vadd.f32 0.0, %v666
        %v668 = vpop.f32.mrf.mxu0
        %669 = vdwg.mxu0
        %670 = vmatpush.bf16.msra.mxu0 0
        %671 = vmatpush.bf16.msra.mxu0 0
        %672 = vmatpush.bf16.msra.mxu0 0
        %673 = vmatpush.bf16.msra.mxu0 0
        %674 = vmatpush.bf16.msra.mxu0 0
        %675 = vmatpush.bf16.msra.mxu0 0
        %676 = vmatpush.bf16.msra.mxu0 0
        %677 = vmatpush.bf16.msra.mxu0 %v655
        %678 = vmatmul.bf16.gmra.mxu0 %v648
        %v679 = vpop.f32.mrf.mxu0
        %v680 = vadd.f32 0.0, %v679
        %v681 = vpop.f32.mrf.mxu0
        %682 = vdwg.mxu0
        %v683 = vpack.c.bf16 %v667, %v667
        %v684 = vpack.c.bf16 %v680, %v680
        %v685 = vld [vmem:[%s5] sm:$0xff]
        %v686 = vld [vmem:[%s5 + $0x8] sm:$0xff]
        %v687 = vld [vmem:[%s5 + $0x10] sm:$0xff]
        %v688 = vld [vmem:[%s5 + $0x18] sm:$0xff]
        %v689 = vld [vmem:[%s5 + $0x20] sm:$0xff]
        %v690 = vld [vmem:[%s5 + $0x28] sm:$0xff]
        %v691 = vld [vmem:[%s5 + $0x30] sm:$0xff]
        %v692 = vld [vmem:[%s5 + $0x38] sm:$0xff]
        %v693 = vld [vmem:[%s5 + $0x40] sm:$0xff]
        %v694 = vld [vmem:[%s5 + $0x48] sm:$0xff]
        %v695 = vld [vmem:[%s5 + $0x50] sm:$0xff]
        %v696 = vld [vmem:[%s5 + $0x58] sm:$0xff]
        %v697 = vld [vmem:[%s5 + $0x60] sm:$0xff]
        %v698 = vld [vmem:[%s5 + $0x68] sm:$0xff]
        %v699 = vld [vmem:[%s5 + $0x70] sm:$0xff]
        %v700 = vld [vmem:[%s5 + $0x78] sm:$0xff]
        %v701 = vld [vmem:[%s5 + $0x80] sm:$0xff]
        %v702 = vld [vmem:[%s5 + $0x88] sm:$0xff]
        %v703 = vld [vmem:[%s5 + $0x90] sm:$0xff]
        %v704 = vld [vmem:[%s5 + $0x98] sm:$0xff]
        %v705 = vld [vmem:[%s5 + $0xa0] sm:$0xff]
        %v706 = vld [vmem:[%s5 + $0xa8] sm:$0xff]
        %v707 = vld [vmem:[%s5 + $0xb0] sm:$0xff]
        %v708 = vld [vmem:[%s5 + $0xb8] sm:$0xff]
        %v709 = vld [vmem:[%s5 + $0xc0] sm:$0xff]
        %v710 = vld [vmem:[%s5 + $0xc8] sm:$0xff]
        %v711 = vld [vmem:[%s5 + $0xd0] sm:$0xff]
        %v712 = vld [vmem:[%s5 + $0xd8] sm:$0xff]
        %v713 = vld [vmem:[%s5 + $0xe0] sm:$0xff]
        %v714 = vld [vmem:[%s5 + $0xe8] sm:$0xff]
        %v715 = vld [vmem:[%s5 + $0xf0] sm:$0xff]
        %v716 = vld [vmem:[%s5 + $0xf8] sm:$0xff]
        %s717 = scalar_lea.vmem %s4, 2
        %v718 = vld [vmem:[%s717] sm:$0x3]
        %v720 = vsel %vm646, %v718, 0
        %722 = vmatpush.bf16.msra.mxu0 0
        %723 = vmatpush.bf16.msra.mxu0 0
        %724 = vmatpush.bf16.msra.mxu0 0
        %725 = vmatpush.bf16.msra.mxu0 0
        %726 = vmatpush.bf16.msra.mxu0 0
        %727 = vmatpush.bf16.msra.mxu0 0
        %728 = vmatpush.bf16.msra.mxu0 0
        %729 = vmatpush.bf16.msra.mxu0 %v652
        %730 = vmatmul.bf16.gmra.mxu0 %v720
        %v731 = vpop.f32.mrf.mxu0
        %v732 = vadd.f32 0.0, %v731
        %v733 = vpop.f32.mrf.mxu0
        %734 = vdwg.mxu0
        %735 = vmatpush.bf16.msra.mxu0 0
        %736 = vmatpush.bf16.msra.mxu0 0
        %737 = vmatpush.bf16.msra.mxu0 0
        %738 = vmatpush.bf16.msra.mxu0 0
        %739 = vmatpush.bf16.msra.mxu0 0
        %740 = vmatpush.bf16.msra.mxu0 0
        %741 = vmatpush.bf16.msra.mxu0 0
        %742 = vmatpush.bf16.msra.mxu0 %v655
        %743 = vmatmul.bf16.gmra.mxu0 %v720
        %v744 = vpop.f32.mrf.mxu0
        %v745 = vadd.f32 0.0, %v744
        %v746 = vpop.f32.mrf.mxu0
        %747 = vdwg.mxu0
        %v748 = vpack.c.bf16 %v732, %v732
        %v749 = vpack.c.bf16 %v745, %v745
        %s750 = scalar_lea.vmem %s5, 256
        %v751 = vld [vmem:[%s750] sm:$0xff]
        %v752 = vld [vmem:[%s750 + $0x8] sm:$0xff]
        %v753 = vld [vmem:[%s750 + $0x10] sm:$0xff]
        %v754 = vld [vmem:[%s750 + $0x18] sm:$0xff]
        %v755 = vld [vmem:[%s750 + $0x20] sm:$0xff]
        %v756 = vld [vmem:[%s750 + $0x28] sm:$0xff]
        %v757 = vld [vmem:[%s750 + $0x30] sm:$0xff]
        %v758 = vld [vmem:[%s750 + $0x38] sm:$0xff]
        %v759 = vld [vmem:[%s750 + $0x40] sm:$0xff]
        %v760 = vld [vmem:[%s750 + $0x48] sm:$0xff]
        %v761 = vld [vmem:[%s750 + $0x50] sm:$0xff]
        %v762 = vld [vmem:[%s750 + $0x58] sm:$0xff]
        %v763 = vld [vmem:[%s750 + $0x60] sm:$0xff]
        %v764 = vld [vmem:[%s750 + $0x68] sm:$0xff]
        %v765 = vld [vmem:[%s750 + $0x70] sm:$0xff]
        %v766 = vld [vmem:[%s750 + $0x78] sm:$0xff]
        %v767 = vld [vmem:[%s750 + $0x80] sm:$0xff]
        %v768 = vld [vmem:[%s750 + $0x88] sm:$0xff]
        %v769 = vld [vmem:[%s750 + $0x90] sm:$0xff]
        %v770 = vld [vmem:[%s750 + $0x98] sm:$0xff]
        %v771 = vld [vmem:[%s750 + $0xa0] sm:$0xff]
        %v772 = vld [vmem:[%s750 + $0xa8] sm:$0xff]
        %v773 = vld [vmem:[%s750 + $0xb0] sm:$0xff]
        %v774 = vld [vmem:[%s750 + $0xb8] sm:$0xff]
        %v775 = vld [vmem:[%s750 + $0xc0] sm:$0xff]
        %v776 = vld [vmem:[%s750 + $0xc8] sm:$0xff]
        %v777 = vld [vmem:[%s750 + $0xd0] sm:$0xff]
        %v778 = vld [vmem:[%s750 + $0xd8] sm:$0xff]
        %v779 = vld [vmem:[%s750 + $0xe0] sm:$0xff]
        %v780 = vld [vmem:[%s750 + $0xe8] sm:$0xff]
        %v781 = vld [vmem:[%s750 + $0xf0] sm:$0xff]
        %v782 = vld [vmem:[%s750 + $0xf8] sm:$0xff]
        %v815 = vunpack.c.l.b16 %v751
        %v816 = vunpack.c.h.b16 %v751
        %v817 = vunpack.c.l.b16 %v752
        %v818 = vunpack.c.h.b16 %v752
        %v819 = vunpack.c.l.b16 %v753
        %v820 = vunpack.c.h.b16 %v753
        %v821 = vunpack.c.l.b16 %v754
        %v822 = vunpack.c.h.b16 %v754
        %v823 = vunpack.c.l.b16 %v755
        %v824 = vunpack.c.h.b16 %v755
        %v825 = vunpack.c.l.b16 %v756
        %v826 = vunpack.c.h.b16 %v756
        %v827 = vunpack.c.l.b16 %v757
        %v828 = vunpack.c.h.b16 %v757
        %v829 = vunpack.c.l.b16 %v758
        %v830 = vunpack.c.h.b16 %v758
        %v831 = vunpack.c.l.b16 %v759
        %v832 = vunpack.c.h.b16 %v759
        %v833 = vunpack.c.l.b16 %v760
        %v834 = vunpack.c.h.b16 %v760
        %v835 = vunpack.c.l.b16 %v761
        %v836 = vunpack.c.h.b16 %v761
        %v837 = vunpack.c.l.b16 %v762
        %v838 = vunpack.c.h.b16 %v762
        %v839 = vunpack.c.l.b16 %v763
        %v840 = vunpack.c.h.b16 %v763
        %v841 = vunpack.c.l.b16 %v764
        %v842 = vunpack.c.h.b16 %v764
        %v843 = vunpack.c.l.b16 %v765
        %v844 = vunpack.c.h.b16 %v765
        %v845 = vunpack.c.l.b16 %v766
        %v846 = vunpack.c.h.b16 %v766
        %v847 = vunpack.c.l.b16 %v767
        %v848 = vunpack.c.h.b16 %v767
        %v849 = vunpack.c.l.b16 %v768
        %v850 = vunpack.c.h.b16 %v768
        %v851 = vunpack.c.l.b16 %v769
        %v852 = vunpack.c.h.b16 %v769
        %v853 = vunpack.c.l.b16 %v770
        %v854 = vunpack.c.h.b16 %v770
        %v855 = vunpack.c.l.b16 %v771
        %v856 = vunpack.c.h.b16 %v771
        %v857 = vunpack.c.l.b16 %v772
        %v858 = vunpack.c.h.b16 %v772
        %v859 = vunpack.c.l.b16 %v773
        %v860 = vunpack.c.h.b16 %v773
        %v861 = vunpack.c.l.b16 %v774
        %v862 = vunpack.c.h.b16 %v774
        %v863 = vunpack.c.l.b16 %v775
        %v864 = vunpack.c.h.b16 %v775
        %v865 = vunpack.c.l.b16 %v776
        %v866 = vunpack.c.h.b16 %v776
        %v867 = vunpack.c.l.b16 %v777
        %v868 = vunpack.c.h.b16 %v777
        %v869 = vunpack.c.l.b16 %v778
        %v870 = vunpack.c.h.b16 %v778
        %v871 = vunpack.c.l.b16 %v779
        %v872 = vunpack.c.h.b16 %v779
        %v873 = vunpack.c.l.b16 %v780
        %v874 = vunpack.c.h.b16 %v780
        %v875 = vunpack.c.l.b16 %v781
        %v876 = vunpack.c.h.b16 %v781
        %v877 = vunpack.c.l.b16 %v782
        %v878 = vunpack.c.h.b16 %v782
        %v879 = vpack.c.b16 %v817, %v815
        %v880 = vpack.c.b16 %v818, %v816
        %v881 = vpack.c.b16 %v821, %v819
        %v882 = vpack.c.b16 %v822, %v820
        %v883 = vpack.c.b16 %v825, %v823
        %v884 = vpack.c.b16 %v826, %v824
        %v885 = vpack.c.b16 %v829, %v827
        %v886 = vpack.c.b16 %v830, %v828
        %v887 = vpack.c.b16 %v833, %v831
        %v888 = vpack.c.b16 %v834, %v832
        %v889 = vpack.c.b16 %v837, %v835
        %v890 = vpack.c.b16 %v838, %v836
        %v891 = vpack.c.b16 %v841, %v839
        %v892 = vpack.c.b16 %v842, %v840
        %v893 = vpack.c.b16 %v845, %v843
        %v894 = vpack.c.b16 %v846, %v844
        %v895 = vpack.c.b16 %v849, %v847
        %v896 = vpack.c.b16 %v850, %v848
        %v897 = vpack.c.b16 %v853, %v851
        %v898 = vpack.c.b16 %v854, %v852
        %v899 = vpack.c.b16 %v857, %v855
        %v900 = vpack.c.b16 %v858, %v856
        %v901 = vpack.c.b16 %v861, %v859
        %v902 = vpack.c.b16 %v862, %v860
        %v903 = vpack.c.b16 %v865, %v863
        %v904 = vpack.c.b16 %v866, %v864
        %v905 = vpack.c.b16 %v869, %v867
        %v906 = vpack.c.b16 %v870, %v868
        %v907 = vpack.c.b16 %v873, %v871
        %v908 = vpack.c.b16 %v874, %v872
        %v909 = vpack.c.b16 %v877, %v875
        %v910 = vpack.c.b16 %v878, %v876
        %943 = vmatpush.bf16.msra.mxu0 %v893
        %944 = vmatpush.bf16.msra.mxu0 %v891
        %945 = vmatpush.bf16.msra.mxu0 %v889
        %946 = vmatpush.bf16.msra.mxu0 %v887
        %947 = vmatpush.bf16.msra.mxu0 %v885
        %948 = vmatpush.bf16.msra.mxu0 %v883
        %949 = vmatpush.bf16.msra.mxu0 %v881
        %950 = vmatpush.bf16.msra.mxu0 %v879
        %951 = vmatmul.bf16.gmra.mxu0 %v748
        %v952 = vpop.f32.mrf.mxu0
        %v953 = vadd.f32 0.0, %v952
        %v954 = vpop.f32.mrf.mxu0
        %955 = vdwg.mxu0
        %956 = vmatpush.bf16.msra.mxu0 %v909
        %957 = vmatpush.bf16.msra.mxu0 %v907
        %958 = vmatpush.bf16.msra.mxu0 %v905
        %959 = vmatpush.bf16.msra.mxu0 %v903
        %960 = vmatpush.bf16.msra.mxu0 %v901
        %961 = vmatpush.bf16.msra.mxu0 %v899
        %962 = vmatpush.bf16.msra.mxu0 %v897
        %963 = vmatpush.bf16.msra.mxu0 %v895
        %964 = vmatmul.bf16.gmra.mxu0 %v749
        %v965 = vpop.f32.mrf.mxu0
        %v966 = vadd.f32 %v953, %v965
        %v967 = vpop.f32.mrf.mxu0
        %968 = vdwg.mxu0
        %969 = vmatpush.bf16.msra.mxu0 %v894
        %970 = vmatpush.bf16.msra.mxu0 %v892
        %971 = vmatpush.bf16.msra.mxu0 %v890
        %972 = vmatpush.bf16.msra.mxu0 %v888
        %973 = vmatpush.bf16.msra.mxu0 %v886
        %974 = vmatpush.bf16.msra.mxu0 %v884
        %975 = vmatpush.bf16.msra.mxu0 %v882
        %976 = vmatpush.bf16.msra.mxu0 %v880
        %977 = vmatmul.bf16.gmra.mxu0 %v748
        %v978 = vpop.f32.mrf.mxu0
        %v979 = vadd.f32 0.0, %v978
        %v980 = vpop.f32.mrf.mxu0
        %981 = vdwg.mxu0
        %982 = vmatpush.bf16.msra.mxu0 %v910
        %983 = vmatpush.bf16.msra.mxu0 %v908
        %984 = vmatpush.bf16.msra.mxu0 %v906
        %985 = vmatpush.bf16.msra.mxu0 %v904
        %986 = vmatpush.bf16.msra.mxu0 %v902
        %987 = vmatpush.bf16.msra.mxu0 %v900
        %988 = vmatpush.bf16.msra.mxu0 %v898
        %989 = vmatpush.bf16.msra.mxu0 %v896
        %990 = vmatmul.bf16.gmra.mxu0 %v749
        %v991 = vpop.f32.mrf.mxu0
        %v992 = vadd.f32 %v979, %v991
        %v993 = vpop.f32.mrf.mxu0
        %994 = vdwg.mxu0
        %v1027 = vunpack.c.l.b16 %v685
        %v1028 = vunpack.c.h.b16 %v685
        %v1029 = vunpack.c.l.b16 %v686
        %v1030 = vunpack.c.h.b16 %v686
        %v1031 = vunpack.c.l.b16 %v687
        %v1032 = vunpack.c.h.b16 %v687
        %v1033 = vunpack.c.l.b16 %v688
        %v1034 = vunpack.c.h.b16 %v688
        %v1035 = vunpack.c.l.b16 %v689
        %v1036 = vunpack.c.h.b16 %v689
        %v1037 = vunpack.c.l.b16 %v690
        %v1038 = vunpack.c.h.b16 %v690
        %v1039 = vunpack.c.l.b16 %v691
        %v1040 = vunpack.c.h.b16 %v691
        %v1041 = vunpack.c.l.b16 %v692
        %v1042 = vunpack.c.h.b16 %v692
        %v1043 = vunpack.c.l.b16 %v693
        %v1044 = vunpack.c.h.b16 %v693
        %v1045 = vunpack.c.l.b16 %v694
        %v1046 = vunpack.c.h.b16 %v694
        %v1047 = vunpack.c.l.b16 %v695
        %v1048 = vunpack.c.h.b16 %v695
        %v1049 = vunpack.c.l.b16 %v696
        %v1050 = vunpack.c.h.b16 %v696
        %v1051 = vunpack.c.l.b16 %v697
        %v1052 = vunpack.c.h.b16 %v697
        %v1053 = vunpack.c.l.b16 %v698
        %v1054 = vunpack.c.h.b16 %v698
        %v1055 = vunpack.c.l.b16 %v699
        %v1056 = vunpack.c.h.b16 %v699
        %v1057 = vunpack.c.l.b16 %v700
        %v1058 = vunpack.c.h.b16 %v700
        %v1059 = vunpack.c.l.b16 %v701
        %v1060 = vunpack.c.h.b16 %v701
        %v1061 = vunpack.c.l.b16 %v702
        %v1062 = vunpack.c.h.b16 %v702
        %v1063 = vunpack.c.l.b16 %v703
        %v1064 = vunpack.c.h.b16 %v703
        %v1065 = vunpack.c.l.b16 %v704
        %v1066 = vunpack.c.h.b16 %v704
        %v1067 = vunpack.c.l.b16 %v705
        %v1068 = vunpack.c.h.b16 %v705
        %v1069 = vunpack.c.l.b16 %v706
        %v1070 = vunpack.c.h.b16 %v706
        %v1071 = vunpack.c.l.b16 %v707
        %v1072 = vunpack.c.h.b16 %v707
        %v1073 = vunpack.c.l.b16 %v708
        %v1074 = vunpack.c.h.b16 %v708
        %v1075 = vunpack.c.l.b16 %v709
        %v1076 = vunpack.c.h.b16 %v709
        %v1077 = vunpack.c.l.b16 %v710
        %v1078 = vunpack.c.h.b16 %v710
        %v1079 = vunpack.c.l.b16 %v711
        %v1080 = vunpack.c.h.b16 %v711
        %v1081 = vunpack.c.l.b16 %v712
        %v1082 = vunpack.c.h.b16 %v712
        %v1083 = vunpack.c.l.b16 %v713
        %v1084 = vunpack.c.h.b16 %v713
        %v1085 = vunpack.c.l.b16 %v714
        %v1086 = vunpack.c.h.b16 %v714
        %v1087 = vunpack.c.l.b16 %v715
        %v1088 = vunpack.c.h.b16 %v715
        %v1089 = vunpack.c.l.b16 %v716
        %v1090 = vunpack.c.h.b16 %v716
        %v1091 = vpack.c.b16 %v1029, %v1027
        %v1092 = vpack.c.b16 %v1030, %v1028
        %v1093 = vpack.c.b16 %v1033, %v1031
        %v1094 = vpack.c.b16 %v1034, %v1032
        %v1095 = vpack.c.b16 %v1037, %v1035
        %v1096 = vpack.c.b16 %v1038, %v1036
        %v1097 = vpack.c.b16 %v1041, %v1039
        %v1098 = vpack.c.b16 %v1042, %v1040
        %v1099 = vpack.c.b16 %v1045, %v1043
        %v1100 = vpack.c.b16 %v1046, %v1044
        %v1101 = vpack.c.b16 %v1049, %v1047
        %v1102 = vpack.c.b16 %v1050, %v1048
        %v1103 = vpack.c.b16 %v1053, %v1051
        %v1104 = vpack.c.b16 %v1054, %v1052
        %v1105 = vpack.c.b16 %v1057, %v1055
        %v1106 = vpack.c.b16 %v1058, %v1056
        %v1107 = vpack.c.b16 %v1061, %v1059
        %v1108 = vpack.c.b16 %v1062, %v1060
        %v1109 = vpack.c.b16 %v1065, %v1063
        %v1110 = vpack.c.b16 %v1066, %v1064
        %v1111 = vpack.c.b16 %v1069, %v1067
        %v1112 = vpack.c.b16 %v1070, %v1068
        %v1113 = vpack.c.b16 %v1073, %v1071
        %v1114 = vpack.c.b16 %v1074, %v1072
        %v1115 = vpack.c.b16 %v1077, %v1075
        %v1116 = vpack.c.b16 %v1078, %v1076
        %v1117 = vpack.c.b16 %v1081, %v1079
        %v1118 = vpack.c.b16 %v1082, %v1080
        %v1119 = vpack.c.b16 %v1085, %v1083
        %v1120 = vpack.c.b16 %v1086, %v1084
        %v1121 = vpack.c.b16 %v1089, %v1087
        %v1122 = vpack.c.b16 %v1090, %v1088
        %1155 = vmatpush.bf16.msra.mxu0 %v1105
        %1156 = vmatpush.bf16.msra.mxu0 %v1103
        %1157 = vmatpush.bf16.msra.mxu0 %v1101
        %1158 = vmatpush.bf16.msra.mxu0 %v1099
        %1159 = vmatpush.bf16.msra.mxu0 %v1097
        %1160 = vmatpush.bf16.msra.mxu0 %v1095
        %1161 = vmatpush.bf16.msra.mxu0 %v1093
        %1162 = vmatpush.bf16.msra.mxu0 %v1091
        %1163 = vmatmul.bf16.gmra.mxu0 %v683
        %v1164 = vpop.f32.mrf.mxu0
        %v1165 = vadd.f32 %v966, %v1164
        %v1166 = vpop.f32.mrf.mxu0
        %1167 = vdwg.mxu0
        %1168 = vmatpush.bf16.msra.mxu0 %v1121
        %1169 = vmatpush.bf16.msra.mxu0 %v1119
        %1170 = vmatpush.bf16.msra.mxu0 %v1117
        %1171 = vmatpush.bf16.msra.mxu0 %v1115
        %1172 = vmatpush.bf16.msra.mxu0 %v1113
        %1173 = vmatpush.bf16.msra.mxu0 %v1111
        %1174 = vmatpush.bf16.msra.mxu0 %v1109
        %1175 = vmatpush.bf16.msra.mxu0 %v1107
        %1176 = vmatmul.bf16.gmra.mxu0 %v684
        %v1177 = vpop.f32.mrf.mxu0
        %v1178 = vadd.f32 %v1165, %v1177
        %v1179 = vpop.f32.mrf.mxu0
        %1180 = vdwg.mxu0
        %1181 = vmatpush.bf16.msra.mxu0 %v1106
        %1182 = vmatpush.bf16.msra.mxu0 %v1104
        %1183 = vmatpush.bf16.msra.mxu0 %v1102
        %1184 = vmatpush.bf16.msra.mxu0 %v1100
        %1185 = vmatpush.bf16.msra.mxu0 %v1098
        %1186 = vmatpush.bf16.msra.mxu0 %v1096
        %1187 = vmatpush.bf16.msra.mxu0 %v1094
        %1188 = vmatpush.bf16.msra.mxu0 %v1092
        %1189 = vmatmul.bf16.gmra.mxu0 %v683
        %v1190 = vpop.f32.mrf.mxu0
        %v1191 = vadd.f32 %v992, %v1190
        %v1192 = vpop.f32.mrf.mxu0
        %1193 = vdwg.mxu0
        %1194 = vmatpush.bf16.msra.mxu0 %v1122
        %1195 = vmatpush.bf16.msra.mxu0 %v1120
        %1196 = vmatpush.bf16.msra.mxu0 %v1118
        %1197 = vmatpush.bf16.msra.mxu0 %v1116
        %1198 = vmatpush.bf16.msra.mxu0 %v1114
        %1199 = vmatpush.bf16.msra.mxu0 %v1112
        %1200 = vmatpush.bf16.msra.mxu0 %v1110
        %1201 = vmatpush.bf16.msra.mxu0 %v1108
        %1202 = vmatmul.bf16.gmra.mxu0 %v684
        %v1203 = vpop.f32.mrf.mxu0
        %v1204 = vadd.f32 %v1191, %v1203
        %v1205 = vpop.f32.mrf.mxu0
        %1206 = vdwg.mxu0
        %s1207 = scalar_lea.vmem %s4, 4
        %v1208 = vld [vmem:[%s1207] sm:$0x3]
        %v1210 = vsel %vm646, %v1208, 0
        %1212 = vmatpush.bf16.msra.mxu0 0
        %1213 = vmatpush.bf16.msra.mxu0 0
        %1214 = vmatpush.bf16.msra.mxu0 0
        %1215 = vmatpush.bf16.msra.mxu0 0
        %1216 = vmatpush.bf16.msra.mxu0 0
        %1217 = vmatpush.bf16.msra.mxu0 0
        %1218 = vmatpush.bf16.msra.mxu0 0
        %1219 = vmatpush.bf16.msra.mxu0 %v652
        %1220 = vmatmul.bf16.gmra.mxu0 %v1210
        %v1221 = vpop.f32.mrf.mxu0
        %v1222 = vadd.f32 0.0, %v1221
        %v1223 = vpop.f32.mrf.mxu0
        %1224 = vdwg.mxu0
        %1225 = vmatpush.bf16.msra.mxu0 0
        %1226 = vmatpush.bf16.msra.mxu0 0
        %1227 = vmatpush.bf16.msra.mxu0 0
        %1228 = vmatpush.bf16.msra.mxu0 0
        %1229 = vmatpush.bf16.msra.mxu0 0
        %1230 = vmatpush.bf16.msra.mxu0 0
        %1231 = vmatpush.bf16.msra.mxu0 0
        %1232 = vmatpush.bf16.msra.mxu0 %v655
        %1233 = vmatmul.bf16.gmra.mxu0 %v1210
        %v1234 = vpop.f32.mrf.mxu0
        %v1235 = vadd.f32 0.0, %v1234
        %v1236 = vpop.f32.mrf.mxu0
        %1237 = vdwg.mxu0
        %v1238 = vpack.c.bf16 %v1222, %v1222
        %v1239 = vpack.c.bf16 %v1235, %v1235
        %s1240 = scalar_lea.vmem %s5, 512
        %v1241 = vld [vmem:[%s1240] sm:$0xff]
        %v1242 = vld [vmem:[%s1240 + $0x8] sm:$0xff]
        %v1243 = vld [vmem:[%s1240 + $0x10] sm:$0xff]
        %v1244 = vld [vmem:[%s1240 + $0x18] sm:$0xff]
        %v1245 = vld [vmem:[%s1240 + $0x20] sm:$0xff]
        %v1246 = vld [vmem:[%s1240 + $0x28] sm:$0xff]
        %v1247 = vld [vmem:[%s1240 + $0x30] sm:$0xff]
        %v1248 = vld [vmem:[%s1240 + $0x38] sm:$0xff]
        %v1249 = vld [vmem:[%s1240 + $0x40] sm:$0xff]
        %v1250 = vld [vmem:[%s1240 + $0x48] sm:$0xff]
        %v1251 = vld [vmem:[%s1240 + $0x50] sm:$0xff]
        %v1252 = vld [vmem:[%s1240 + $0x58] sm:$0xff]
        %v1253 = vld [vmem:[%s1240 + $0x60] sm:$0xff]
        %v1254 = vld [vmem:[%s1240 + $0x68] sm:$0xff]
        %v1255 = vld [vmem:[%s1240 + $0x70] sm:$0xff]
        %v1256 = vld [vmem:[%s1240 + $0x78] sm:$0xff]
        %v1257 = vld [vmem:[%s1240 + $0x80] sm:$0xff]
        %v1258 = vld [vmem:[%s1240 + $0x88] sm:$0xff]
        %v1259 = vld [vmem:[%s1240 + $0x90] sm:$0xff]
        %v1260 = vld [vmem:[%s1240 + $0x98] sm:$0xff]
        %v1261 = vld [vmem:[%s1240 + $0xa0] sm:$0xff]
        %v1262 = vld [vmem:[%s1240 + $0xa8] sm:$0xff]
        %v1263 = vld [vmem:[%s1240 + $0xb0] sm:$0xff]
        %v1264 = vld [vmem:[%s1240 + $0xb8] sm:$0xff]
        %v1265 = vld [vmem:[%s1240 + $0xc0] sm:$0xff]
        %v1266 = vld [vmem:[%s1240 + $0xc8] sm:$0xff]
        %v1267 = vld [vmem:[%s1240 + $0xd0] sm:$0xff]
        %v1268 = vld [vmem:[%s1240 + $0xd8] sm:$0xff]
        %v1269 = vld [vmem:[%s1240 + $0xe0] sm:$0xff]
        %v1270 = vld [vmem:[%s1240 + $0xe8] sm:$0xff]
        %v1271 = vld [vmem:[%s1240 + $0xf0] sm:$0xff]
        %v1272 = vld [vmem:[%s1240 + $0xf8] sm:$0xff]
        %v1305 = vunpack.c.l.b16 %v1241
        %v1306 = vunpack.c.h.b16 %v1241
        %v1307 = vunpack.c.l.b16 %v1242
        %v1308 = vunpack.c.h.b16 %v1242
        %v1309 = vunpack.c.l.b16 %v1243
        %v1310 = vunpack.c.h.b16 %v1243
        %v1311 = vunpack.c.l.b16 %v1244
        %v1312 = vunpack.c.h.b16 %v1244
        %v1313 = vunpack.c.l.b16 %v1245
        %v1314 = vunpack.c.h.b16 %v1245
        %v1315 = vunpack.c.l.b16 %v1246
        %v1316 = vunpack.c.h.b16 %v1246
        %v1317 = vunpack.c.l.b16 %v1247
        %v1318 = vunpack.c.h.b16 %v1247
        %v1319 = vunpack.c.l.b16 %v1248
        %v1320 = vunpack.c.h.b16 %v1248
        %v1321 = vunpack.c.l.b16 %v1249
        %v1322 = vunpack.c.h.b16 %v1249
        %v1323 = vunpack.c.l.b16 %v1250
        %v1324 = vunpack.c.h.b16 %v1250
        %v1325 = vunpack.c.l.b16 %v1251
        %v1326 = vunpack.c.h.b16 %v1251
        %v1327 = vunpack.c.l.b16 %v1252
        %v1328 = vunpack.c.h.b16 %v1252
        %v1329 = vunpack.c.l.b16 %v1253
        %v1330 = vunpack.c.h.b16 %v1253
        %v1331 = vunpack.c.l.b16 %v1254
        %v1332 = vunpack.c.h.b16 %v1254
        %v1333 = vunpack.c.l.b16 %v1255
        %v1334 = vunpack.c.h.b16 %v1255
        %v1335 = vunpack.c.l.b16 %v1256
        %v1336 = vunpack.c.h.b16 %v1256
        %v1337 = vunpack.c.l.b16 %v1257
        %v1338 = vunpack.c.h.b16 %v1257
        %v1339 = vunpack.c.l.b16 %v1258
        %v1340 = vunpack.c.h.b16 %v1258
        %v1341 = vunpack.c.l.b16 %v1259
        %v1342 = vunpack.c.h.b16 %v1259
        %v1343 = vunpack.c.l.b16 %v1260
        %v1344 = vunpack.c.h.b16 %v1260
        %v1345 = vunpack.c.l.b16 %v1261
        %v1346 = vunpack.c.h.b16 %v1261
        %v1347 = vunpack.c.l.b16 %v1262
        %v1348 = vunpack.c.h.b16 %v1262
        %v1349 = vunpack.c.l.b16 %v1263
        %v1350 = vunpack.c.h.b16 %v1263
        %v1351 = vunpack.c.l.b16 %v1264
        %v1352 = vunpack.c.h.b16 %v1264
        %v1353 = vunpack.c.l.b16 %v1265
        %v1354 = vunpack.c.h.b16 %v1265
        %v1355 = vunpack.c.l.b16 %v1266
        %v1356 = vunpack.c.h.b16 %v1266
        %v1357 = vunpack.c.l.b16 %v1267
        %v1358 = vunpack.c.h.b16 %v1267
        %v1359 = vunpack.c.l.b16 %v1268
        %v1360 = vunpack.c.h.b16 %v1268
        %v1361 = vunpack.c.l.b16 %v1269
        %v1362 = vunpack.c.h.b16 %v1269
        %v1363 = vunpack.c.l.b16 %v1270
        %v1364 = vunpack.c.h.b16 %v1270
        %v1365 = vunpack.c.l.b16 %v1271
        %v1366 = vunpack.c.h.b16 %v1271
        %v1367 = vunpack.c.l.b16 %v1272
        %v1368 = vunpack.c.h.b16 %v1272
        %v1369 = vpack.c.b16 %v1307, %v1305
        %v1370 = vpack.c.b16 %v1308, %v1306
        %v1371 = vpack.c.b16 %v1311, %v1309
        %v1372 = vpack.c.b16 %v1312, %v1310
        %v1373 = vpack.c.b16 %v1315, %v1313
        %v1374 = vpack.c.b16 %v1316, %v1314
        %v1375 = vpack.c.b16 %v1319, %v1317
        %v1376 = vpack.c.b16 %v1320, %v1318
        %v1377 = vpack.c.b16 %v1323, %v1321
        %v1378 = vpack.c.b16 %v1324, %v1322
        %v1379 = vpack.c.b16 %v1327, %v1325
        %v1380 = vpack.c.b16 %v1328, %v1326
        %v1381 = vpack.c.b16 %v1331, %v1329
        %v1382 = vpack.c.b16 %v1332, %v1330
        %v1383 = vpack.c.b16 %v1335, %v1333
        %v1384 = vpack.c.b16 %v1336, %v1334
        %v1385 = vpack.c.b16 %v1339, %v1337
        %v1386 = vpack.c.b16 %v1340, %v1338
        %v1387 = vpack.c.b16 %v1343, %v1341
        %v1388 = vpack.c.b16 %v1344, %v1342
        %v1389 = vpack.c.b16 %v1347, %v1345
        %v1390 = vpack.c.b16 %v1348, %v1346
        %v1391 = vpack.c.b16 %v1351, %v1349
        %v1392 = vpack.c.b16 %v1352, %v1350
        %v1393 = vpack.c.b16 %v1355, %v1353
        %v1394 = vpack.c.b16 %v1356, %v1354
        %v1395 = vpack.c.b16 %v1359, %v1357
        %v1396 = vpack.c.b16 %v1360, %v1358
        %v1397 = vpack.c.b16 %v1363, %v1361
        %v1398 = vpack.c.b16 %v1364, %v1362
        %v1399 = vpack.c.b16 %v1367, %v1365
        %v1400 = vpack.c.b16 %v1368, %v1366
        %1433 = vmatpush.bf16.msra.mxu0 %v1383
        %1434 = vmatpush.bf16.msra.mxu0 %v1381
        %1435 = vmatpush.bf16.msra.mxu0 %v1379
        %1436 = vmatpush.bf16.msra.mxu0 %v1377
        %1437 = vmatpush.bf16.msra.mxu0 %v1375
        %1438 = vmatpush.bf16.msra.mxu0 %v1373
        %1439 = vmatpush.bf16.msra.mxu0 %v1371
        %1440 = vmatpush.bf16.msra.mxu0 %v1369
        %1441 = vmatmul.bf16.gmra.mxu0 %v1238
        %v1442 = vpop.f32.mrf.mxu0
        %v1443 = vadd.f32 0.0, %v1442
        %v1444 = vpop.f32.mrf.mxu0
        %1445 = vdwg.mxu0
        %1446 = vmatpush.bf16.msra.mxu0 %v1399
        %1447 = vmatpush.bf16.msra.mxu0 %v1397
        %1448 = vmatpush.bf16.msra.mxu0 %v1395
        %1449 = vmatpush.bf16.msra.mxu0 %v1393
        %1450 = vmatpush.bf16.msra.mxu0 %v1391
        %1451 = vmatpush.bf16.msra.mxu0 %v1389
        %1452 = vmatpush.bf16.msra.mxu0 %v1387
        %1453 = vmatpush.bf16.msra.mxu0 %v1385
        %1454 = vmatmul.bf16.gmra.mxu0 %v1239
        %v1455 = vpop.f32.mrf.mxu0
        %v1456 = vadd.f32 %v1443, %v1455
        %v1457 = vpop.f32.mrf.mxu0
        %1458 = vdwg.mxu0
        %1459 = vmatpush.bf16.msra.mxu0 %v1384
        %1460 = vmatpush.bf16.msra.mxu0 %v1382
        %1461 = vmatpush.bf16.msra.mxu0 %v1380
        %1462 = vmatpush.bf16.msra.mxu0 %v1378
        %1463 = vmatpush.bf16.msra.mxu0 %v1376
        %1464 = vmatpush.bf16.msra.mxu0 %v1374
        %1465 = vmatpush.bf16.msra.mxu0 %v1372
        %1466 = vmatpush.bf16.msra.mxu0 %v1370
        %1467 = vmatmul.bf16.gmra.mxu0 %v1238
        %v1468 = vpop.f32.mrf.mxu0
        %v1469 = vadd.f32 0.0, %v1468
        %v1470 = vpop.f32.mrf.mxu0
        %1471 = vdwg.mxu0
        %1472 = vmatpush.bf16.msra.mxu0 %v1400
        %1473 = vmatpush.bf16.msra.mxu0 %v1398
        %1474 = vmatpush.bf16.msra.mxu0 %v1396
        %1475 = vmatpush.bf16.msra.mxu0 %v1394
        %1476 = vmatpush.bf16.msra.mxu0 %v1392
        %1477 = vmatpush.bf16.msra.mxu0 %v1390
        %1478 = vmatpush.bf16.msra.mxu0 %v1388
        %1479 = vmatpush.bf16.msra.mxu0 %v1386
        %1480 = vmatmul.bf16.gmra.mxu0 %v1239
        %v1481 = vpop.f32.mrf.mxu0
        %v1482 = vadd.f32 %v1469, %v1481
        %v1483 = vpop.f32.mrf.mxu0
        %1484 = vdwg.mxu0
        %v1485 = vadd.f32 %v1178, %v1456
        %v1486 = vadd.f32 %v1204, %v1482
        %v1487 = vld [vmem:[%s6] sm:$0x3]
        %v1489 = vperm.slane %v1487, 0
        %v1490 = vperm.slane %v1487, 1
        %v1493 = vadd.f32 %v1485, %v1489
        %v1494 = vadd.f32 %v1486, %v1490
        %v1495 = vmul.f32 %v1493, 0.2
        %v1496 = vmul.f32 %v1494, 0.2
        %v1497 = vmax.f32 %v1493, %v1495
        %v1498 = vmax.f32 %v1494, %v1496
        %v1499 = vpack.c.bf16 %v1497, %v1497
        %v1500 = vpack.c.bf16 %v1498, %v1498
        %v1501 = vld [vmem:[%s7] sm:$0x1]
        %vm1502 = vcmask 31744
        %v1504 = vsel %vm1502, %v1501, 0
        %vm1506 = vcmask 1041408
        %v1508 = vsel %vm1506, %v1499, 0
        %v1511 = vsel %vm1506, %v1500, 0
        %1513 = vmatpush.bf16.msra.mxu0 0
        %1514 = vmatpush.bf16.msra.mxu0 0
        %1515 = vmatpush.bf16.msra.mxu0 0
        %1516 = vmatpush.bf16.msra.mxu0 0
        %1517 = vmatpush.bf16.msra.mxu0 0
        %1518 = vmatpush.bf16.msra.mxu0 0
        %1519 = vmatpush.bf16.msra.mxu0 0
        %1520 = vmatpush.bf16.msra.mxu0 %v1508
        %1521 = vmatmul.bf16.gmra.mxu0 %v1504
        %v1522 = vpop.f32.mrf.mxu0
        %v1523 = vadd.f32 0.0, %v1522
        %v1524 = vpop.f32.mrf.mxu0
        %1525 = vdwg.mxu0
        %1526 = vmatpush.bf16.msra.mxu0 0
        %1527 = vmatpush.bf16.msra.mxu0 0
        %1528 = vmatpush.bf16.msra.mxu0 0
        %1529 = vmatpush.bf16.msra.mxu0 0
        %1530 = vmatpush.bf16.msra.mxu0 0
        %1531 = vmatpush.bf16.msra.mxu0 0
        %1532 = vmatpush.bf16.msra.mxu0 0
        %1533 = vmatpush.bf16.msra.mxu0 %v1511
        %1534 = vmatmul.bf16.gmra.mxu0 %v1504
        %v1535 = vpop.f32.mrf.mxu0
        %v1536 = vadd.f32 0.0, %v1535
        %v1537 = vpop.f32.mrf.mxu0
        %1538 = vdwg.mxu0
        %v1539 = vpack.c.bf16 %v1523, %v1523
        %v1540 = vpack.c.bf16 %v1536, %v1536
        %v1541 = vld [vmem:[%s8] sm:$0xf]
        %v1542 = vld [vmem:[%s8 + $0x4] sm:$0xf]
        %v1543 = vld [vmem:[%s8 + $0x8] sm:$0xf]
        %v1544 = vld [vmem:[%s8 + $0xc] sm:$0xf]
        %v1545 = vld [vmem:[%s8 + $0x10] sm:$0xf]
        %v1546 = vld [vmem:[%s8 + $0x14] sm:$0xf]
        %v1547 = vld [vmem:[%s8 + $0x18] sm:$0xf]
        %v1548 = vld [vmem:[%s8 + $0x1c] sm:$0xf]
        %v1549 = vld [vmem:[%s8 + $0x20] sm:$0xf]
        %v1550 = vld [vmem:[%s8 + $0x24] sm:$0xf]
        %v1551 = vld [vmem:[%s8 + $0x28] sm:$0xf]
        %v1552 = vld [vmem:[%s8 + $0x2c] sm:$0xf]
        %v1553 = vld [vmem:[%s8 + $0x30] sm:$0xf]
        %v1554 = vld [vmem:[%s8 + $0x34] sm:$0xf]
        %v1555 = vld [vmem:[%s8 + $0x38] sm:$0xf]
        %v1556 = vld [vmem:[%s8 + $0x3c] sm:$0xf]
        %v1557 = vld [vmem:[%s8 + $0x40] sm:$0xf]
        %v1558 = vld [vmem:[%s8 + $0x44] sm:$0xf]
        %v1559 = vld [vmem:[%s8 + $0x48] sm:$0xf]
        %v1560 = vld [vmem:[%s8 + $0x4c] sm:$0xf]
        %v1561 = vld [vmem:[%s8 + $0x50] sm:$0xf]
        %v1562 = vld [vmem:[%s8 + $0x54] sm:$0xf]
        %v1563 = vld [vmem:[%s8 + $0x58] sm:$0xf]
        %v1564 = vld [vmem:[%s8 + $0x5c] sm:$0xf]
        %v1565 = vld [vmem:[%s8 + $0x60] sm:$0xf]
        %v1566 = vld [vmem:[%s8 + $0x64] sm:$0xf]
        %v1567 = vld [vmem:[%s8 + $0x68] sm:$0xf]
        %v1568 = vld [vmem:[%s8 + $0x6c] sm:$0xf]
        %v1569 = vld [vmem:[%s8 + $0x70] sm:$0xf]
        %v1570 = vld [vmem:[%s8 + $0x74] sm:$0xf]
        %v1571 = vld [vmem:[%s8 + $0x78] sm:$0xf]
        %v1572 = vld [vmem:[%s8 + $0x7c] sm:$0xf]
        %s1573 = scalar_lea.vmem %s7, 1
        %v1574 = vld [vmem:[%s1573] sm:$0x1]
        %v1576 = vsel %vm1502, %v1574, 0
        %1578 = vmatpush.bf16.msra.mxu0 0
        %1579 = vmatpush.bf16.msra.mxu0 0
        %1580 = vmatpush.bf16.msra.mxu0 0
        %1581 = vmatpush.bf16.msra.mxu0 0
        %1582 = vmatpush.bf16.msra.mxu0 0
        %1583 = vmatpush.bf16.msra.mxu0 0
        %1584 = vmatpush.bf16.msra.mxu0 0
        %1585 = vmatpush.bf16.msra.mxu0 %v1508
        %1586 = vmatmul.bf16.gmra.mxu0 %v1576
        %v1587 = vpop.f32.mrf.mxu0
        %v1588 = vadd.f32 0.0, %v1587
        %v1589 = vpop.f32.mrf.mxu0
        %1590 = vdwg.mxu0
        %1591 = vmatpush.bf16.msra.mxu0 0
        %1592 = vmatpush.bf16.msra.mxu0 0
        %1593 = vmatpush.bf16.msra.mxu0 0
        %1594 = vmatpush.bf16.msra.mxu0 0
        %1595 = vmatpush.bf16.msra.mxu0 0
        %1596 = vmatpush.bf16.msra.mxu0 0
        %1597 = vmatpush.bf16.msra.mxu0 0
        %1598 = vmatpush.bf16.msra.mxu0 %v1511
        %1599 = vmatmul.bf16.gmra.mxu0 %v1576
        %v1600 = vpop.f32.mrf.mxu0
        %v1601 = vadd.f32 0.0, %v1600
        %v1602 = vpop.f32.mrf.mxu0
        %1603 = vdwg.mxu0
        %v1604 = vpack.c.bf16 %v1588, %v1588
        %v1605 = vpack.c.bf16 %v1601, %v1601
        %s1606 = scalar_lea.vmem %s8, 128
        %v1607 = vld [vmem:[%s1606] sm:$0xf]
        %v1608 = vld [vmem:[%s1606 + $0x4] sm:$0xf]
        %v1609 = vld [vmem:[%s1606 + $0x8] sm:$0xf]
        %v1610 = vld [vmem:[%s1606 + $0xc] sm:$0xf]
        %v1611 = vld [vmem:[%s1606 + $0x10] sm:$0xf]
        %v1612 = vld [vmem:[%s1606 + $0x14] sm:$0xf]
        %v1613 = vld [vmem:[%s1606 + $0x18] sm:$0xf]
        %v1614 = vld [vmem:[%s1606 + $0x1c] sm:$0xf]
        %v1615 = vld [vmem:[%s1606 + $0x20] sm:$0xf]
        %v1616 = vld [vmem:[%s1606 + $0x24] sm:$0xf]
        %v1617 = vld [vmem:[%s1606 + $0x28] sm:$0xf]
        %v1618 = vld [vmem:[%s1606 + $0x2c] sm:$0xf]
        %v1619 = vld [vmem:[%s1606 + $0x30] sm:$0xf]
        %v1620 = vld [vmem:[%s1606 + $0x34] sm:$0xf]
        %v1621 = vld [vmem:[%s1606 + $0x38] sm:$0xf]
        %v1622 = vld [vmem:[%s1606 + $0x3c] sm:$0xf]
        %v1623 = vld [vmem:[%s1606 + $0x40] sm:$0xf]
        %v1624 = vld [vmem:[%s1606 + $0x44] sm:$0xf]
        %v1625 = vld [vmem:[%s1606 + $0x48] sm:$0xf]
        %v1626 = vld [vmem:[%s1606 + $0x4c] sm:$0xf]
        %v1627 = vld [vmem:[%s1606 + $0x50] sm:$0xf]
        %v1628 = vld [vmem:[%s1606 + $0x54] sm:$0xf]
        %v1629 = vld [vmem:[%s1606 + $0x58] sm:$0xf]
        %v1630 = vld [vmem:[%s1606 + $0x5c] sm:$0xf]
        %v1631 = vld [vmem:[%s1606 + $0x60] sm:$0xf]
        %v1632 = vld [vmem:[%s1606 + $0x64] sm:$0xf]
        %v1633 = vld [vmem:[%s1606 + $0x68] sm:$0xf]
        %v1634 = vld [vmem:[%s1606 + $0x6c] sm:$0xf]
        %v1635 = vld [vmem:[%s1606 + $0x70] sm:$0xf]
        %v1636 = vld [vmem:[%s1606 + $0x74] sm:$0xf]
        %v1637 = vld [vmem:[%s1606 + $0x78] sm:$0xf]
        %v1638 = vld [vmem:[%s1606 + $0x7c] sm:$0xf]
        %v1671 = vunpack.c.l.b16 %v1607
        %v1672 = vunpack.c.l.b16 %v1608
        %v1673 = vunpack.c.l.b16 %v1609
        %v1674 = vunpack.c.l.b16 %v1610
        %v1675 = vunpack.c.l.b16 %v1611
        %v1676 = vunpack.c.l.b16 %v1612
        %v1677 = vunpack.c.l.b16 %v1613
        %v1678 = vunpack.c.l.b16 %v1614
        %v1679 = vunpack.c.l.b16 %v1615
        %v1680 = vunpack.c.l.b16 %v1616
        %v1681 = vunpack.c.l.b16 %v1617
        %v1682 = vunpack.c.l.b16 %v1618
        %v1683 = vunpack.c.l.b16 %v1619
        %v1684 = vunpack.c.l.b16 %v1620
        %v1685 = vunpack.c.l.b16 %v1621
        %v1686 = vunpack.c.l.b16 %v1622
        %v1687 = vunpack.c.l.b16 %v1623
        %v1688 = vunpack.c.l.b16 %v1624
        %v1689 = vunpack.c.l.b16 %v1625
        %v1690 = vunpack.c.l.b16 %v1626
        %v1691 = vunpack.c.l.b16 %v1627
        %v1692 = vunpack.c.l.b16 %v1628
        %v1693 = vunpack.c.l.b16 %v1629
        %v1694 = vunpack.c.l.b16 %v1630
        %v1695 = vunpack.c.l.b16 %v1631
        %v1696 = vunpack.c.l.b16 %v1632
        %v1697 = vunpack.c.l.b16 %v1633
        %v1698 = vunpack.c.l.b16 %v1634
        %v1699 = vunpack.c.l.b16 %v1635
        %v1700 = vunpack.c.l.b16 %v1636
        %v1701 = vunpack.c.l.b16 %v1637
        %v1702 = vunpack.c.l.b16 %v1638
        %v1703 = vpack.c.b16 %v1672, %v1671
        %v1704 = vpack.c.b16 %v1674, %v1673
        %v1705 = vpack.c.b16 %v1676, %v1675
        %v1706 = vpack.c.b16 %v1678, %v1677
        %v1707 = vpack.c.b16 %v1680, %v1679
        %v1708 = vpack.c.b16 %v1682, %v1681
        %v1709 = vpack.c.b16 %v1684, %v1683
        %v1710 = vpack.c.b16 %v1686, %v1685
        %v1711 = vpack.c.b16 %v1688, %v1687
        %v1712 = vpack.c.b16 %v1690, %v1689
        %v1713 = vpack.c.b16 %v1692, %v1691
        %v1714 = vpack.c.b16 %v1694, %v1693
        %v1715 = vpack.c.b16 %v1696, %v1695
        %v1716 = vpack.c.b16 %v1698, %v1697
        %v1717 = vpack.c.b16 %v1700, %v1699
        %v1718 = vpack.c.b16 %v1702, %v1701
        %1735 = vmatpush.bf16.msra.mxu0 %v1710
        %1736 = vmatpush.bf16.msra.mxu0 %v1709
        %1737 = vmatpush.bf16.msra.mxu0 %v1708
        %1738 = vmatpush.bf16.msra.mxu0 %v1707
        %1739 = vmatpush.bf16.msra.mxu0 %v1706
        %1740 = vmatpush.bf16.msra.mxu0 %v1705
        %1741 = vmatpush.bf16.msra.mxu0 %v1704
        %1742 = vmatpush.bf16.msra.mxu0 %v1703
        %1743 = vmatmul.bf16.gmra.mxu0 %v1604
        %v1744 = vpop.f32.mrf.mxu0
        %v1745 = vadd.f32 0.0, %v1744
        %v1746 = vpop.f32.mrf.mxu0
        %1747 = vdwg.mxu0
        %1748 = vmatpush.bf16.msra.mxu0 %v1718
        %1749 = vmatpush.bf16.msra.mxu0 %v1717
        %1750 = vmatpush.bf16.msra.mxu0 %v1716
        %1751 = vmatpush.bf16.msra.mxu0 %v1715
        %1752 = vmatpush.bf16.msra.mxu0 %v1714
        %1753 = vmatpush.bf16.msra.mxu0 %v1713
        %1754 = vmatpush.bf16.msra.mxu0 %v1712
        %1755 = vmatpush.bf16.msra.mxu0 %v1711
        %1756 = vmatmul.bf16.gmra.mxu0 %v1605
        %v1757 = vpop.f32.mrf.mxu0
        %v1758 = vadd.f32 %v1745, %v1757
        %v1759 = vpop.f32.mrf.mxu0
        %1760 = vdwg.mxu0
        %v1793 = vunpack.c.l.b16 %v1541
        %v1794 = vunpack.c.l.b16 %v1542
        %v1795 = vunpack.c.l.b16 %v1543
        %v1796 = vunpack.c.l.b16 %v1544
        %v1797 = vunpack.c.l.b16 %v1545
        %v1798 = vunpack.c.l.b16 %v1546
        %v1799 = vunpack.c.l.b16 %v1547
        %v1800 = vunpack.c.l.b16 %v1548
        %v1801 = vunpack.c.l.b16 %v1549
        %v1802 = vunpack.c.l.b16 %v1550
        %v1803 = vunpack.c.l.b16 %v1551
        %v1804 = vunpack.c.l.b16 %v1552
        %v1805 = vunpack.c.l.b16 %v1553
        %v1806 = vunpack.c.l.b16 %v1554
        %v1807 = vunpack.c.l.b16 %v1555
        %v1808 = vunpack.c.l.b16 %v1556
        %v1809 = vunpack.c.l.b16 %v1557
        %v1810 = vunpack.c.l.b16 %v1558
        %v1811 = vunpack.c.l.b16 %v1559
        %v1812 = vunpack.c.l.b16 %v1560
        %v1813 = vunpack.c.l.b16 %v1561
        %v1814 = vunpack.c.l.b16 %v1562
        %v1815 = vunpack.c.l.b16 %v1563
        %v1816 = vunpack.c.l.b16 %v1564
        %v1817 = vunpack.c.l.b16 %v1565
        %v1818 = vunpack.c.l.b16 %v1566
        %v1819 = vunpack.c.l.b16 %v1567
        %v1820 = vunpack.c.l.b16 %v1568
        %v1821 = vunpack.c.l.b16 %v1569
        %v1822 = vunpack.c.l.b16 %v1570
        %v1823 = vunpack.c.l.b16 %v1571
        %v1824 = vunpack.c.l.b16 %v1572
        %v1825 = vpack.c.b16 %v1794, %v1793
        %v1826 = vpack.c.b16 %v1796, %v1795
        %v1827 = vpack.c.b16 %v1798, %v1797
        %v1828 = vpack.c.b16 %v1800, %v1799
        %v1829 = vpack.c.b16 %v1802, %v1801
        %v1830 = vpack.c.b16 %v1804, %v1803
        %v1831 = vpack.c.b16 %v1806, %v1805
        %v1832 = vpack.c.b16 %v1808, %v1807
        %v1833 = vpack.c.b16 %v1810, %v1809
        %v1834 = vpack.c.b16 %v1812, %v1811
        %v1835 = vpack.c.b16 %v1814, %v1813
        %v1836 = vpack.c.b16 %v1816, %v1815
        %v1837 = vpack.c.b16 %v1818, %v1817
        %v1838 = vpack.c.b16 %v1820, %v1819
        %v1839 = vpack.c.b16 %v1822, %v1821
        %v1840 = vpack.c.b16 %v1824, %v1823
        %1857 = vmatpush.bf16.msra.mxu0 %v1832
        %1858 = vmatpush.bf16.msra.mxu0 %v1831
        %1859 = vmatpush.bf16.msra.mxu0 %v1830
        %1860 = vmatpush.bf16.msra.mxu0 %v1829
        %1861 = vmatpush.bf16.msra.mxu0 %v1828
        %1862 = vmatpush.bf16.msra.mxu0 %v1827
        %1863 = vmatpush.bf16.msra.mxu0 %v1826
        %1864 = vmatpush.bf16.msra.mxu0 %v1825
        %1865 = vmatmul.bf16.gmra.mxu0 %v1539
        %v1866 = vpop.f32.mrf.mxu0
        %v1867 = vadd.f32 %v1758, %v1866
        %v1868 = vpop.f32.mrf.mxu0
        %1869 = vdwg.mxu0
        %1870 = vmatpush.bf16.msra.mxu0 %v1840
        %1871 = vmatpush.bf16.msra.mxu0 %v1839
        %1872 = vmatpush.bf16.msra.mxu0 %v1838
        %1873 = vmatpush.bf16.msra.mxu0 %v1837
        %1874 = vmatpush.bf16.msra.mxu0 %v1836
        %1875 = vmatpush.bf16.msra.mxu0 %v1835
        %1876 = vmatpush.bf16.msra.mxu0 %v1834
        %1877 = vmatpush.bf16.msra.mxu0 %v1833
        %1878 = vmatmul.bf16.gmra.mxu0 %v1540
        %v1879 = vpop.f32.mrf.mxu0
        %v1880 = vadd.f32 %v1867, %v1879
        %v1881 = vpop.f32.mrf.mxu0
        %1882 = vdwg.mxu0
        %s1883 = scalar_lea.vmem %s7, 2
        %v1884 = vld [vmem:[%s1883] sm:$0x1]
        %v1886 = vsel %vm1502, %v1884, 0
        %1888 = vmatpush.bf16.msra.mxu0 0
        %1889 = vmatpush.bf16.msra.mxu0 0
        %1890 = vmatpush.bf16.msra.mxu0 0
        %1891 = vmatpush.bf16.msra.mxu0 0
        %1892 = vmatpush.bf16.msra.mxu0 0
        %1893 = vmatpush.bf16.msra.mxu0 0
        %1894 = vmatpush.bf16.msra.mxu0 0
        %1895 = vmatpush.bf16.msra.mxu0 %v1508
        %1896 = vmatmul.bf16.gmra.mxu0 %v1886
        %v1897 = vpop.f32.mrf.mxu0
        %v1898 = vadd.f32 0.0, %v1897
        %v1899 = vpop.f32.mrf.mxu0
        %1900 = vdwg.mxu0
        %1901 = vmatpush.bf16.msra.mxu0 0
        %1902 = vmatpush.bf16.msra.mxu0 0
        %1903 = vmatpush.bf16.msra.mxu0 0
        %1904 = vmatpush.bf16.msra.mxu0 0
        %1905 = vmatpush.bf16.msra.mxu0 0
        %1906 = vmatpush.bf16.msra.mxu0 0
        %1907 = vmatpush.bf16.msra.mxu0 0
        %1908 = vmatpush.bf16.msra.mxu0 %v1511
        %1909 = vmatmul.bf16.gmra.mxu0 %v1886
        %v1910 = vpop.f32.mrf.mxu0
        %v1911 = vadd.f32 0.0, %v1910
        %v1912 = vpop.f32.mrf.mxu0
        %1913 = vdwg.mxu0
        %v1914 = vpack.c.bf16 %v1898, %v1898
        %v1915 = vpack.c.bf16 %v1911, %v1911
        %s1916 = scalar_lea.vmem %s8, 256
        %v1917 = vld [vmem:[%s1916] sm:$0xf]
        %v1918 = vld [vmem:[%s1916 + $0x4] sm:$0xf]
        %v1919 = vld [vmem:[%s1916 + $0x8] sm:$0xf]
        %v1920 = vld [vmem:[%s1916 + $0xc] sm:$0xf]
        %v1921 = vld [vmem:[%s1916 + $0x10] sm:$0xf]
        %v1922 = vld [vmem:[%s1916 + $0x14] sm:$0xf]
        %v1923 = vld [vmem:[%s1916 + $0x18] sm:$0xf]
        %v1924 = vld [vmem:[%s1916 + $0x1c] sm:$0xf]
        %v1925 = vld [vmem:[%s1916 + $0x20] sm:$0xf]
        %v1926 = vld [vmem:[%s1916 + $0x24] sm:$0xf]
        %v1927 = vld [vmem:[%s1916 + $0x28] sm:$0xf]
        %v1928 = vld [vmem:[%s1916 + $0x2c] sm:$0xf]
        %v1929 = vld [vmem:[%s1916 + $0x30] sm:$0xf]
        %v1930 = vld [vmem:[%s1916 + $0x34] sm:$0xf]
        %v1931 = vld [vmem:[%s1916 + $0x38] sm:$0xf]
        %v1932 = vld [vmem:[%s1916 + $0x3c] sm:$0xf]
        %v1933 = vld [vmem:[%s1916 + $0x40] sm:$0xf]
        %v1934 = vld [vmem:[%s1916 + $0x44] sm:$0xf]
        %v1935 = vld [vmem:[%s1916 + $0x48] sm:$0xf]
        %v1936 = vld [vmem:[%s1916 + $0x4c] sm:$0xf]
        %v1937 = vld [vmem:[%s1916 + $0x50] sm:$0xf]
        %v1938 = vld [vmem:[%s1916 + $0x54] sm:$0xf]
        %v1939 = vld [vmem:[%s1916 + $0x58] sm:$0xf]
        %v1940 = vld [vmem:[%s1916 + $0x5c] sm:$0xf]
        %v1941 = vld [vmem:[%s1916 + $0x60] sm:$0xf]
        %v1942 = vld [vmem:[%s1916 + $0x64] sm:$0xf]
        %v1943 = vld [vmem:[%s1916 + $0x68] sm:$0xf]
        %v1944 = vld [vmem:[%s1916 + $0x6c] sm:$0xf]
        %v1945 = vld [vmem:[%s1916 + $0x70] sm:$0xf]
        %v1946 = vld [vmem:[%s1916 + $0x74] sm:$0xf]
        %v1947 = vld [vmem:[%s1916 + $0x78] sm:$0xf]
        %v1948 = vld [vmem:[%s1916 + $0x7c] sm:$0xf]
        %v1981 = vunpack.c.l.b16 %v1917
        %v1982 = vunpack.c.l.b16 %v1918
        %v1983 = vunpack.c.l.b16 %v1919
        %v1984 = vunpack.c.l.b16 %v1920
        %v1985 = vunpack.c.l.b16 %v1921
        %v1986 = vunpack.c.l.b16 %v1922
        %v1987 = vunpack.c.l.b16 %v1923
        %v1988 = vunpack.c.l.b16 %v1924
        %v1989 = vunpack.c.l.b16 %v1925
        %v1990 = vunpack.c.l.b16 %v1926
        %v1991 = vunpack.c.l.b16 %v1927
        %v1992 = vunpack.c.l.b16 %v1928
        %v1993 = vunpack.c.l.b16 %v1929
        %v1994 = vunpack.c.l.b16 %v1930
        %v1995 = vunpack.c.l.b16 %v1931
        %v1996 = vunpack.c.l.b16 %v1932
        %v1997 = vunpack.c.l.b16 %v1933
        %v1998 = vunpack.c.l.b16 %v1934
        %v1999 = vunpack.c.l.b16 %v1935
        %v2000 = vunpack.c.l.b16 %v1936
        %v2001 = vunpack.c.l.b16 %v1937
        %v2002 = vunpack.c.l.b16 %v1938
        %v2003 = vunpack.c.l.b16 %v1939
        %v2004 = vunpack.c.l.b16 %v1940
        %v2005 = vunpack.c.l.b16 %v1941
        %v2006 = vunpack.c.l.b16 %v1942
        %v2007 = vunpack.c.l.b16 %v1943
        %v2008 = vunpack.c.l.b16 %v1944
        %v2009 = vunpack.c.l.b16 %v1945
        %v2010 = vunpack.c.l.b16 %v1946
        %v2011 = vunpack.c.l.b16 %v1947
        %v2012 = vunpack.c.l.b16 %v1948
        %v2013 = vpack.c.b16 %v1982, %v1981
        %v2014 = vpack.c.b16 %v1984, %v1983
        %v2015 = vpack.c.b16 %v1986, %v1985
        %v2016 = vpack.c.b16 %v1988, %v1987
        %v2017 = vpack.c.b16 %v1990, %v1989
        %v2018 = vpack.c.b16 %v1992, %v1991
        %v2019 = vpack.c.b16 %v1994, %v1993
        %v2020 = vpack.c.b16 %v1996, %v1995
        %v2021 = vpack.c.b16 %v1998, %v1997
        %v2022 = vpack.c.b16 %v2000, %v1999
        %v2023 = vpack.c.b16 %v2002, %v2001
        %v2024 = vpack.c.b16 %v2004, %v2003
        %v2025 = vpack.c.b16 %v2006, %v2005
        %v2026 = vpack.c.b16 %v2008, %v2007
        %v2027 = vpack.c.b16 %v2010, %v2009
        %v2028 = vpack.c.b16 %v2012, %v2011
        %2045 = vmatpush.bf16.msra.mxu0 %v2020
        %2046 = vmatpush.bf16.msra.mxu0 %v2019
        %2047 = vmatpush.bf16.msra.mxu0 %v2018
        %2048 = vmatpush.bf16.msra.mxu0 %v2017
        %2049 = vmatpush.bf16.msra.mxu0 %v2016
        %2050 = vmatpush.bf16.msra.mxu0 %v2015
        %2051 = vmatpush.bf16.msra.mxu0 %v2014
        %2052 = vmatpush.bf16.msra.mxu0 %v2013
        %2053 = vmatmul.bf16.gmra.mxu0 %v1914
        %v2054 = vpop.f32.mrf.mxu0
        %v2055 = vadd.f32 0.0, %v2054
        %v2056 = vpop.f32.mrf.mxu0
        %2057 = vdwg.mxu0
        %2058 = vmatpush.bf16.msra.mxu0 %v2028
        %2059 = vmatpush.bf16.msra.mxu0 %v2027
        %2060 = vmatpush.bf16.msra.mxu0 %v2026
        %2061 = vmatpush.bf16.msra.mxu0 %v2025
        %2062 = vmatpush.bf16.msra.mxu0 %v2024
        %2063 = vmatpush.bf16.msra.mxu0 %v2023
        %2064 = vmatpush.bf16.msra.mxu0 %v2022
        %2065 = vmatpush.bf16.msra.mxu0 %v2021
        %2066 = vmatmul.bf16.gmra.mxu0 %v1915
        %v2067 = vpop.f32.mrf.mxu0
        %v2068 = vadd.f32 %v2055, %v2067
        %v2069 = vpop.f32.mrf.mxu0
        %2070 = vdwg.mxu0
        %v2071 = vadd.f32 %v1880, %v2068
        %v2072 = vld [vmem:[%s9] sm:$0x1]
        %v2074 = vperm.slane %v2072, 0
        %v2076 = vadd.f32 %v2071, %v2074
        %v2077 = vmul.f32 %v2076, 0.2
        %v2078 = vmax.f32 %v2076, %v2077
        %v2079 = vpack.c.bf16 %v2078, %v2078
        %v2080 = vld [vmem:[%s10] sm:$0x1]
        %vm2081 = vcmask 15360
        %v2083 = vsel %vm2081, %v2080, 0
        %vm2085 = vcmask 1040384
        %v2087 = vsel %vm2085, %v2079, 0
        %2089 = vmatpush.bf16.msra.mxu0 0
        %2090 = vmatpush.bf16.msra.mxu0 0
        %2091 = vmatpush.bf16.msra.mxu0 0
        %2092 = vmatpush.bf16.msra.mxu0 0
        %2093 = vmatpush.bf16.msra.mxu0 0
        %2094 = vmatpush.bf16.msra.mxu0 0
        %2095 = vmatpush.bf16.msra.mxu0 0
        %2096 = vmatpush.bf16.msra.mxu0 %v2087
        %2097 = vmatmul.bf16.gmra.mxu0 %v2083
        %v2098 = vpop.f32.mrf.mxu0
        %v2099 = vadd.f32 0.0, %v2098
        %v2100 = vpop.f32.mrf.mxu0
        %2101 = vdwg.mxu0
        %v2102 = vpack.c.bf16 %v2099, %v2099
        %v2103 = vld [vmem:[%s11] sm:$0xf]
        %v2104 = vld [vmem:[%s11 + $0x4] sm:$0xf]
        %v2105 = vld [vmem:[%s11 + $0x8] sm:$0xf]
        %v2106 = vld [vmem:[%s11 + $0xc] sm:$0xf]
        %v2107 = vld [vmem:[%s11 + $0x10] sm:$0xf]
        %v2108 = vld [vmem:[%s11 + $0x14] sm:$0xf]
        %v2109 = vld [vmem:[%s11 + $0x18] sm:$0xf]
        %v2110 = vld [vmem:[%s11 + $0x1c] sm:$0xf]
        %v2111 = vld [vmem:[%s11 + $0x20] sm:$0xf]
        %v2112 = vld [vmem:[%s11 + $0x24] sm:$0xf]
        %v2113 = vld [vmem:[%s11 + $0x28] sm:$0xf]
        %v2114 = vld [vmem:[%s11 + $0x2c] sm:$0xf]
        %v2115 = vld [vmem:[%s11 + $0x30] sm:$0xf]
        %v2116 = vld [vmem:[%s11 + $0x34] sm:$0xf]
        %v2117 = vld [vmem:[%s11 + $0x38] sm:$0xf]
        %v2118 = vld [vmem:[%s11 + $0x3c] sm:$0xf]
        %s2119 = scalar_lea.vmem %s10, 1
        %v2120 = vld [vmem:[%s2119] sm:$0x1]
        %v2122 = vsel %vm2081, %v2120, 0
        %2124 = vmatpush.bf16.msra.mxu0 0
        %2125 = vmatpush.bf16.msra.mxu0 0
        %2126 = vmatpush.bf16.msra.mxu0 0
        %2127 = vmatpush.bf16.msra.mxu0 0
        %2128 = vmatpush.bf16.msra.mxu0 0
        %2129 = vmatpush.bf16.msra.mxu0 0
        %2130 = vmatpush.bf16.msra.mxu0 0
        %2131 = vmatpush.bf16.msra.mxu0 %v2087
        %2132 = vmatmul.bf16.gmra.mxu0 %v2122
        %v2133 = vpop.f32.mrf.mxu0
        %v2134 = vadd.f32 0.0, %v2133
        %v2135 = vpop.f32.mrf.mxu0
        %2136 = vdwg.mxu0
        %v2137 = vpack.c.bf16 %v2134, %v2134
        %s2138 = scalar_lea.vmem %s11, 64
        %v2139 = vld [vmem:[%s2138] sm:$0xf]
        %v2140 = vld [vmem:[%s2138 + $0x4] sm:$0xf]
        %v2141 = vld [vmem:[%s2138 + $0x8] sm:$0xf]
        %v2142 = vld [vmem:[%s2138 + $0xc] sm:$0xf]
        %v2143 = vld [vmem:[%s2138 + $0x10] sm:$0xf]
        %v2144 = vld [vmem:[%s2138 + $0x14] sm:$0xf]
        %v2145 = vld [vmem:[%s2138 + $0x18] sm:$0xf]
        %v2146 = vld [vmem:[%s2138 + $0x1c] sm:$0xf]
        %v2147 = vld [vmem:[%s2138 + $0x20] sm:$0xf]
        %v2148 = vld [vmem:[%s2138 + $0x24] sm:$0xf]
        %v2149 = vld [vmem:[%s2138 + $0x28] sm:$0xf]
        %v2150 = vld [vmem:[%s2138 + $0x2c] sm:$0xf]
        %v2151 = vld [vmem:[%s2138 + $0x30] sm:$0xf]
        %v2152 = vld [vmem:[%s2138 + $0x34] sm:$0xf]
        %v2153 = vld [vmem:[%s2138 + $0x38] sm:$0xf]
        %v2154 = vld [vmem:[%s2138 + $0x3c] sm:$0xf]
        %v2171 = vunpack.c.l.b16 %v2139
        %v2172 = vunpack.c.l.b16 %v2140
        %v2173 = vunpack.c.l.b16 %v2141
        %v2174 = vunpack.c.l.b16 %v2142
        %v2175 = vunpack.c.l.b16 %v2143
        %v2176 = vunpack.c.l.b16 %v2144
        %v2177 = vunpack.c.l.b16 %v2145
        %v2178 = vunpack.c.l.b16 %v2146
        %v2179 = vunpack.c.l.b16 %v2147
        %v2180 = vunpack.c.l.b16 %v2148
        %v2181 = vunpack.c.l.b16 %v2149
        %v2182 = vunpack.c.l.b16 %v2150
        %v2183 = vunpack.c.l.b16 %v2151
        %v2184 = vunpack.c.l.b16 %v2152
        %v2185 = vunpack.c.l.b16 %v2153
        %v2186 = vunpack.c.l.b16 %v2154
        %v2187 = vpack.c.b16 %v2172, %v2171
        %v2188 = vpack.c.b16 %v2174, %v2173
        %v2189 = vpack.c.b16 %v2176, %v2175
        %v2190 = vpack.c.b16 %v2178, %v2177
        %v2191 = vpack.c.b16 %v2180, %v2179
        %v2192 = vpack.c.b16 %v2182, %v2181
        %v2193 = vpack.c.b16 %v2184, %v2183
        %v2194 = vpack.c.b16 %v2186, %v2185
        %2203 = vmatpush.bf16.msra.mxu0 %v2194
        %2204 = vmatpush.bf16.msra.mxu0 %v2193
        %2205 = vmatpush.bf16.msra.mxu0 %v2192
        %2206 = vmatpush.bf16.msra.mxu0 %v2191
        %2207 = vmatpush.bf16.msra.mxu0 %v2190
        %2208 = vmatpush.bf16.msra.mxu0 %v2189
        %2209 = vmatpush.bf16.msra.mxu0 %v2188
        %2210 = vmatpush.bf16.msra.mxu0 %v2187
        %2211 = vmatmul.bf16.gmra.mxu0 %v2137
        %v2212 = vpop.f32.mrf.mxu0
        %v2213 = vadd.f32 0.0, %v2212
        %v2214 = vpop.f32.mrf.mxu0
        %2215 = vdwg.mxu0
        %v2232 = vunpack.c.l.b16 %v2103
        %v2233 = vunpack.c.l.b16 %v2104
        %v2234 = vunpack.c.l.b16 %v2105
        %v2235 = vunpack.c.l.b16 %v2106
        %v2236 = vunpack.c.l.b16 %v2107
        %v2237 = vunpack.c.l.b16 %v2108
        %v2238 = vunpack.c.l.b16 %v2109
        %v2239 = vunpack.c.l.b16 %v2110
        %v2240 = vunpack.c.l.b16 %v2111
        %v2241 = vunpack.c.l.b16 %v2112
        %v2242 = vunpack.c.l.b16 %v2113
        %v2243 = vunpack.c.l.b16 %v2114
        %v2244 = vunpack.c.l.b16 %v2115
        %v2245 = vunpack.c.l.b16 %v2116
        %v2246 = vunpack.c.l.b16 %v2117
        %v2247 = vunpack.c.l.b16 %v2118
        %v2248 = vpack.c.b16 %v2233, %v2232
        %v2249 = vpack.c.b16 %v2235, %v2234
        %v2250 = vpack.c.b16 %v2237, %v2236
        %v2251 = vpack.c.b16 %v2239, %v2238
        %v2252 = vpack.c.b16 %v2241, %v2240
        %v2253 = vpack.c.b16 %v2243, %v2242
        %v2254 = vpack.c.b16 %v2245, %v2244
        %v2255 = vpack.c.b16 %v2247, %v2246
        %2264 = vmatpush.bf16.msra.mxu0 %v2255
        %2265 = vmatpush.bf16.msra.mxu0 %v2254
        %2266 = vmatpush.bf16.msra.mxu0 %v2253
        %2267 = vmatpush.bf16.msra.mxu0 %v2252
        %2268 = vmatpush.bf16.msra.mxu0 %v2251
        %2269 = vmatpush.bf16.msra.mxu0 %v2250
        %2270 = vmatpush.bf16.msra.mxu0 %v2249
        %2271 = vmatpush.bf16.msra.mxu0 %v2248
        %2272 = vmatmul.bf16.gmra.mxu0 %v2102
        %v2273 = vpop.f32.mrf.mxu0
        %v2274 = vadd.f32 %v2213, %v2273
        %v2275 = vpop.f32.mrf.mxu0
        %2276 = vdwg.mxu0
        %s2277 = scalar_lea.vmem %s10, 2
        %v2278 = vld [vmem:[%s2277] sm:$0x1]
        %v2280 = vsel %vm2081, %v2278, 0
        %2282 = vmatpush.bf16.msra.mxu0 0
        %2283 = vmatpush.bf16.msra.mxu0 0
        %2284 = vmatpush.bf16.msra.mxu0 0
        %2285 = vmatpush.bf16.msra.mxu0 0
        %2286 = vmatpush.bf16.msra.mxu0 0
        %2287 = vmatpush.bf16.msra.mxu0 0
        %2288 = vmatpush.bf16.msra.mxu0 0
        %2289 = vmatpush.bf16.msra.mxu0 %v2087
        %2290 = vmatmul.bf16.gmra.mxu0 %v2280
        %v2291 = vpop.f32.mrf.mxu0
        %v2292 = vadd.f32 0.0, %v2291
        %v2293 = vpop.f32.mrf.mxu0
        %2294 = vdwg.mxu0
        %v2295 = vpack.c.bf16 %v2292, %v2292
        %s2296 = scalar_lea.vmem %s11, 128
        %v2297 = vld [vmem:[%s2296] sm:$0xf]
        %v2298 = vld [vmem:[%s2296 + $0x4] sm:$0xf]
        %v2299 = vld [vmem:[%s2296 + $0x8] sm:$0xf]
        %v2300 = vld [vmem:[%s2296 + $0xc] sm:$0xf]
        %v2301 = vld [vmem:[%s2296 + $0x10] sm:$0xf]
        %v2302 = vld [vmem:[%s2296 + $0x14] sm:$0xf]
        %v2303 = vld [vmem:[%s2296 + $0x18] sm:$0xf]
        %v2304 = vld [vmem:[%s2296 + $0x1c] sm:$0xf]
        %v2305 = vld [vmem:[%s2296 + $0x20] sm:$0xf]
        %v2306 = vld [vmem:[%s2296 + $0x24] sm:$0xf]
        %v2307 = vld [vmem:[%s2296 + $0x28] sm:$0xf]
        %v2308 = vld [vmem:[%s2296 + $0x2c] sm:$0xf]
        %v2309 = vld [vmem:[%s2296 + $0x30] sm:$0xf]
        %v2310 = vld [vmem:[%s2296 + $0x34] sm:$0xf]
        %v2311 = vld [vmem:[%s2296 + $0x38] sm:$0xf]
        %v2312 = vld [vmem:[%s2296 + $0x3c] sm:$0xf]
        %v2329 = vunpack.c.l.b16 %v2297
        %v2330 = vunpack.c.l.b16 %v2298
        %v2331 = vunpack.c.l.b16 %v2299
        %v2332 = vunpack.c.l.b16 %v2300
        %v2333 = vunpack.c.l.b16 %v2301
        %v2334 = vunpack.c.l.b16 %v2302
        %v2335 = vunpack.c.l.b16 %v2303
        %v2336 = vunpack.c.l.b16 %v2304
        %v2337 = vunpack.c.l.b16 %v2305
        %v2338 = vunpack.c.l.b16 %v2306
        %v2339 = vunpack.c.l.b16 %v2307
        %v2340 = vunpack.c.l.b16 %v2308
        %v2341 = vunpack.c.l.b16 %v2309
        %v2342 = vunpack.c.l.b16 %v2310
        %v2343 = vunpack.c.l.b16 %v2311
        %v2344 = vunpack.c.l.b16 %v2312
        %v2345 = vpack.c.b16 %v2330, %v2329
        %v2346 = vpack.c.b16 %v2332, %v2331
        %v2347 = vpack.c.b16 %v2334, %v2333
        %v2348 = vpack.c.b16 %v2336, %v2335
        %v2349 = vpack.c.b16 %v2338, %v2337
        %v2350 = vpack.c.b16 %v2340, %v2339
        %v2351 = vpack.c.b16 %v2342, %v2341
        %v2352 = vpack.c.b16 %v2344, %v2343
        %2361 = vmatpush.bf16.msra.mxu0 %v2352
        %2362 = vmatpush.bf16.msra.mxu0 %v2351
        %2363 = vmatpush.bf16.msra.mxu0 %v2350
        %2364 = vmatpush.bf16.msra.mxu0 %v2349
        %2365 = vmatpush.bf16.msra.mxu0 %v2348
        %2366 = vmatpush.bf16.msra.mxu0 %v2347
        %2367 = vmatpush.bf16.msra.mxu0 %v2346
        %2368 = vmatpush.bf16.msra.mxu0 %v2345
        %2369 = vmatmul.bf16.gmra.mxu0 %v2295
        %v2370 = vpop.f32.mrf.mxu0
        %v2371 = vadd.f32 0.0, %v2370
        %v2372 = vpop.f32.mrf.mxu0
        %2373 = vdwg.mxu0
        %v2374 = vadd.f32 %v2274, %v2371
        %v2375 = vld [vmem:[%s12] sm:$0x1]
        %v2376 = vadd.f32 %v2374, %v2375
        %v2377 = vmul.f32 %v2376, 0.2
        %v2378 = vmax.f32 %v2376, %v2377
        %vm2379 = vcmask 516096
        %2380 = vst.msk [vmem:[%s432] sm:$0x1] %vm2379, %v2378
        %s2381 = sand.u32 %s313, 1
        %s2382 = scalar_lea.sflag [#allocation3], %s2381
        %s2383 = sand.u32 %s313, 1
        %s2384 = scalar_lea.vmem [#allocation2], %s2383
        // Predicated region
        $region73: #{encoder_forward.1} parent=71 // pred_check
          %p2385 = pneg %p323
        $region74: #{encoder_forward.1} parent=71 // pred_check_branch
          %2387 = sbr.rel (%p2385) target = $region76
        $region75: #{encoder_forward.1} parent=71 // pred_region
          %2389 = vsyncadd %s2382, 0
          %s2390 = scalar_lea.hbm %s13, %s27
          %s2392 = sshll.u32 %s2384, 4
          %s2393 = int_to_ptr.vmem [resolvable:$true] %s2392
          %s2394 = sshll.u32 %s2390, 4
          %s2395 = int_to_ptr.hbm [resolvable:$true] %s2394
          %2397 = dma.vmem_to_hbm [thread:$0]  %s2393, 16, %s2395, %s2382
        $region76: #{encoder_forward.1} parent=71 // pred_fallthru
          _
      $region72: #{encoder_forward.1} parent=5 // pred_fallthru
        _
      %p2398 = scmp.le.s32.totalorder 2, %s22
      // Predicated region
      $region77: #{encoder_forward.1} parent=5 // pred_check
        %p2399 = pneg %p2398
      $region78: #{encoder_forward.1} parent=5 // pred_check_branch
        %2401 = sbr.rel (%p2399) target = $region80
      $region79: #{encoder_forward.1} parent=5 // pred_region
        %s2402 = ssub.s32 %s22, 2
        // Predicated region
        $region81: #{encoder_forward.1} parent=79 // pred_check
          %p2403 = pneg %p329
        $region82: #{encoder_forward.1} parent=79 // pred_check_branch
          %2405 = sbr.rel (%p2403) target = $region84
        $region83: #{encoder_forward.1} parent=79 // pred_region
          %s2406 = sand.u32 %s314, 1
          %s2407 = scalar_lea.sflag [#allocation3], %s2406
          %s2408 = sand.u32 %s314, 1
          %s2409 = scalar_lea.vmem [#allocation2], %s2408
          %2411 = dma.done %s2407, 16
        $region84: #{encoder_forward.1} parent=79 // pred_fallthru
          _
      $region80: #{encoder_forward.1} parent=5 // pred_fallthru
        _
    $region6: #{encoder_forward.1} parent=1 // loop_footer
      %s26 = sadd.s32 1, %s22
    $region7: #{encoder_forward.1} parent=1 // loop_footer_branch
      %21 = sbr.rel target = $region3
    $region8: #{encoder_forward.1} parent=1 // loop_exit
      _
    %2412 = vsyncpa [#allocation3], 1
    %s2413 = scalar_lea.sflag [#allocation3], 1
    %2414 = vsyncpa %s2413, 1

</llo_original>
